<compile_context>
chip_gen: v7x
topology: tpu7x:2x2x1
jax: 0.10.0
libtpu: 0.0.40
codegen_flags: <defaults>
</compile_context>

<pallas_src>
import functools
import itertools
import math

import jax
import jax.numpy as jnp
from jax.experimental import pallas as pl
from jax.experimental.pallas import tpu as pltpu


def _round_up(x, m):
    return ((x + m - 1) // m) * m


def _make_mlp_kernel(n_layers):
    """Build a kernel for x -> [Linear+ReLU]*(n_layers-1) -> Linear+tanh."""

    def kernel(*refs):
        x_ref, o_ref = refs[0], refs[-1]
        wb = refs[1:-1]  # (w0, b0, w1, b1, ..., w_{L-1}, b_{L-1})
        # Cast streamed f32 activations to bf16 in-kernel (VPU, hidden under DMA);
        # avoids a standalone HBM astype pass in the wrapper.
        h = x_ref[...].astype(wb[0].dtype)
        for li in range(n_layers):
            w_ref, b_ref = wb[2 * li], wb[2 * li + 1]
            z = jnp.dot(h, w_ref[...], preferred_element_type=jnp.float32) + b_ref[...]
            if li + 1 < n_layers:
                h = jnp.maximum(z, 0.0).astype(wb[2 * (li + 1)].dtype)
            else:
                # tanh goes to the EUP slot -> effectively free; store bf16 (lane-dense).
                o_ref[...] = jnp.tanh(z).astype(o_ref.dtype)

    return kernel


def init_params(key, matrix_length, layers_size, input_matrices, output_size,
                *, pixel_mode=False, dtype=jnp.bfloat16, pad_to=128):
    """Deterministic init mimicking nn.Linear's U(-1/sqrt(fan_in), 1/sqrt(fan_in)).

    Weights are stored already transposed to (in_features, out_features) so the kernel
    uses x @ W (PyTorch computes x @ W^T + b). Hidden widths AND the output width are
    zero-padded up to a multiple of `pad_to` for MXU/vreg alignment and lane-dense
    stores; this is numerically identical because padded units have zero weight and
    zero bias (ReLU(0)=0) and padded rows of the following layer are zero.
    """
    matrix_size = matrix_length * matrix_length
    out_true = 1 if pixel_mode else output_size * matrix_size
    dims = [len(input_matrices) * matrix_size] + list(layers_size) + [out_true]
    padded = [dims[0]] + [_round_up(d, pad_to) for d in dims[1:]]

    params = []
    for i in range(len(dims) - 1):
        fan_in, fan_out = dims[i], dims[i + 1]
        p_in, p_out = padded[i], padded[i + 1]
        key, kw, kb = jax.random.split(key, 3)
        bound = 1.0 / math.sqrt(fan_in)
        w = jax.random.uniform(kw, (fan_in, fan_out), jnp.float32, -bound, bound)
        b = jax.random.uniform(kb, (1, fan_out), jnp.float32, -bound, bound)
        w = jnp.pad(w, ((0, p_in - fan_in), (0, p_out - fan_out)))
        b = jnp.pad(b, ((0, 0), (0, p_out - fan_out)))
        # bf16 weights (half the HBM bytes, double MXU rate on v6e/v7x); f32 biases
        # because they are added to the f32 accumulator.
        params.append((w.astype(dtype), b.astype(jnp.float32)))
    return params


def _pick_batch_tile(B, block_b, in_dim, out_dim_p, resident_bytes, budget_bytes):
    """Largest 8-multiple tile <= block_b that (a) gives >=2 grid steps when B allows it
    and (b) keeps the double-buffered x/y tiles + resident weights under budget."""
    tb = min(block_b, max(8, _round_up(-(-B // 2), 8)))

    def vmem_est(t):
        return (2 * t * in_dim * 4          # double-buffered f32 x tiles
                + 2 * t * out_dim_p * 2     # double-buffered bf16 y tiles
                + resident_bytes            # single-buffered weights/biases
                + (1 << 20))                # compiler scratch headroom

    while tb > 8 and vmem_est(tb) > budget_bytes:
        tb = max(8, _round_up(tb // 2, 8))
    return tb


@functools.partial(
    jax.jit,
    static_argnames=("matrix_length", "input_matrices", "output_size",
                     "pixel_mode", "block_b"),
)
def fully_connected_forward(batch, params, *, matrix_length, input_matrices,
                            output_size, pixel_mode=False, block_b=2048):
    """Forward pass of FullyConnectedNetwork. Returns bf16 (documented dtype policy)."""
    B = batch.shape[0]
    matrix_size = matrix_length * matrix_length
    ims = tuple(int(i) for i in input_matrices)
    n_in = len(ims)
    n_layers = len(params)

    in_dim = params[0][0].shape[0]
    out_dim_p = params[-1][0].shape[1]          # padded output width
    out_true = 1 if pixel_mode else output_size * matrix_size
    assert in_dim == n_in * matrix_size

    # Glue: channel select + flatten. Static slice when channels are contiguous
    # (avoids a gathered HBM copy); x stays f32 — the bf16 cast happens in-kernel.
    if ims == tuple(range(ims[0], ims[0] + n_in)):
        sel = batch[:, ims[0]:ims[0] + n_in, :, :]
    else:
        sel = jnp.take(batch, jnp.array(ims), axis=1)
    x = sel.reshape(B, in_dim)

    resident_bytes = sum(w.size * w.dtype.itemsize + b.size * b.dtype.itemsize
                         for w, b in params)
    vmem_budget = 48 * 1024 * 1024              # safe on v7x (64 MiB physical VMEM)
    tb = _pick_batch_tile(B, block_b, in_dim, out_dim_p, resident_bytes, vmem_budget)
    padded_b = _round_up(B, tb)
    if padded_b != B:
        x = jnp.pad(x, ((0, padded_b - B), (0, 0)))

    dims = [in_dim] + [w.shape[1] for w, _ in params]
    flops = 2 * padded_b * sum(dims[i] * dims[i + 1] for i in range(n_layers))
    bytes_accessed = (x.size * x.dtype.itemsize
                      + resident_bytes
                      + padded_b * out_dim_p * 2)
    cost = pl.CostEstimate(
        flops=int(flops),
        transcendentals=int(padded_b * out_dim_p),
        bytes_accessed=int(bytes_accessed),
    )

    # BlockSpecs: x / y streamed per batch tile; weights & biases resident with a
    # constant index_map and single-buffered (no point double-buffering constants).
    in_specs = [pl.BlockSpec((tb, in_dim), lambda i: (i, 0))]
    for w, b in params:
        in_specs.append(pl.BlockSpec(w.shape, lambda i: (0, 0),
                                     pipeline_mode=pl.Buffered(1)))
        in_specs.append(pl.BlockSpec(b.shape, lambda i: (0, 0),
                                     pipeline_mode=pl.Buffered(1)))

    y = pl.pallas_call(
        _make_mlp_kernel(n_layers),
        out_shape=jax.ShapeDtypeStruct((padded_b, out_dim_p), jnp.bfloat16),
        grid=(padded_b // tb,),
        in_specs=in_specs,
        out_specs=pl.BlockSpec((tb, out_dim_p), lambda i: (i, 0)),
        compiler_params=pltpu.CompilerParams(
            dimension_semantics=("parallel",),
            vmem_limit_bytes=vmem_budget,
        ),
        cost_estimate=cost,
    )(x, *itertools.chain.from_iterable(params))

    # Glue: drop batch / output-width padding, reshape back.
    y = y[:B, :out_true]
    if pixel_mode:
        return y
    return y.reshape(B, output_size, matrix_length, matrix_length)


def _reference_forward(batch, params, matrix_length, input_matrices, output_size,
                       pixel_mode=False):
    """Plain-JAX reference using the same padded bf16 params and the same cast points."""
    B = batch.shape[0]
    matrix_size = matrix_length * matrix_length
    x = batch[:, jnp.array(input_matrices), :, :].reshape(
        B, len(input_matrices) * matrix_size)
    h = x.astype(params[0][0].dtype)
    y = None
    for li, (w, b) in enumerate(params):
        z = jnp.dot(h, w, preferred_element_type=jnp.float32) + b
        if li + 1 < len(params):
            h = jnp.maximum(z, 0.0).astype(params[li + 1][0].dtype)
        else:
            y = jnp.tanh(z).astype(jnp.bfloat16)
    out_true = 1 if pixel_mode else output_size * matrix_size
    y = y[:, :out_true]
    if pixel_mode:
        return y
    return y.reshape(B, output_size, matrix_length, matrix_length)


if __name__ == "__main__":
    # Small shapes consistent with the module's forward:
    #   batch of 2, 6 input matrices of 16x16, 2 hidden layers of 32, 3 output matrices.
    B = 2
    matrix_length = 16
    layers_size = (32, 32)
    input_matrices = (0, 1, 2, 3, 4, 5)
    output_size = 3

    key = jax.random.PRNGKey(0)
    key, k_x = jax.random.split(key)
    batch = jax.random.normal(
        k_x, (B, len(input_matrices), matrix_length, matrix_length), jnp.float32
    )
    params = init_params(key, matrix_length, layers_size, input_matrices, output_size)

    out = fully_connected_forward(
        batch, params,
        matrix_length=matrix_length,
        input_matrices=input_matrices,
        output_size=output_size,
    )
    out = jax.block_until_ready(out)

    ref = _reference_forward(batch, params, matrix_length, input_matrices, output_size)
    assert out.shape == (B, output_size, matrix_length, matrix_length)
    assert out.dtype == jnp.bfloat16
    err = float(jnp.max(jnp.abs(out.astype(jnp.float32) - ref.astype(jnp.float32))))
    assert err < 1e-2, err

    print("KERNEL_OK")
</pallas_src>

<mosaic_0001>
module attributes {stable_mosaic.version = 11 : i64} {
  func.func @kernel(%arg0: i32, %arg1: memref<8x1536xf32, #tpu.memory_space<vmem>>, %arg2: memref<1536x128xbf16, #tpu.memory_space<vmem>>, %arg3: memref<1x128xf32, #tpu.memory_space<vmem>>, %arg4: memref<128x128xbf16, #tpu.memory_space<vmem>>, %arg5: memref<1x128xf32, #tpu.memory_space<vmem>>, %arg6: memref<128x768xbf16, #tpu.memory_space<vmem>>, %arg7: memref<1x768xf32, #tpu.memory_space<vmem>>, %arg8: memref<8x768xbf16, #tpu.memory_space<vmem>>) attributes {dimension_semantics = [#tpu.dimension_semantics<parallel>], iteration_bounds = array<i64: 1>, scalar_prefetch = 0 : i64, scratch_operands = 0 : i64, tpu.core_type = #tpu.core_type<tc>, window_params = [{transform_indices = @transform_0, window_bounds = array<i64: 8, 1536>}, {pipeline_mode = #tpu.pipeline_mode<synchronous>, transform_indices = @transform_1, window_bounds = array<i64: 1536, 128>}, {pipeline_mode = #tpu.pipeline_mode<synchronous>, transform_indices = @transform_2, window_bounds = array<i64: 1, 128>}, {pipeline_mode = #tpu.pipeline_mode<synchronous>, transform_indices = @transform_3, window_bounds = array<i64: 128, 128>}, {pipeline_mode = #tpu.pipeline_mode<synchronous>, transform_indices = @transform_4, window_bounds = array<i64: 1, 128>}, {pipeline_mode = #tpu.pipeline_mode<synchronous>, transform_indices = @transform_5, window_bounds = array<i64: 128, 768>}, {pipeline_mode = #tpu.pipeline_mode<synchronous>, transform_indices = @transform_6, window_bounds = array<i64: 1, 768>}, {transform_indices = @transform_7, window_bounds = array<i64: 8, 768>}]} {
    %c0 = arith.constant 0 : index
    %c0_0 = arith.constant 0 : index
    %0 = vector.load %arg1[%c0, %c0_0] : memref<8x1536xf32, #tpu.memory_space<vmem>>, vector<8x1536xf32>
    %1 = arith.truncf %0 : vector<8x1536xf32> to vector<8x1536xbf16>
    %c0_1 = arith.constant 0 : index
    %c0_2 = arith.constant 0 : index
    %2 = vector.load %arg2[%c0_1, %c0_2] : memref<1536x128xbf16, #tpu.memory_space<vmem>>, vector<1536x128xbf16>
    %cst = arith.constant dense<0.000000e+00> : vector<8x128xf32>
    %3 = tpu.matmul %1, %2, %cst {dimension_numbers = #tpu.dot_dimension_numbers<[1], [0], [0], [1], [0, 0, 1, 1], [], []>} : vector<8x1536xbf16>, vector<1536x128xbf16>, vector<8x128xf32> -> vector<8x128xf32>
    %c0_3 = arith.constant 0 : index
    %c0_4 = arith.constant 0 : index
    %4 = vector.load %arg3[%c0_3, %c0_4] : memref<1x128xf32, #tpu.memory_space<vmem>>, vector<1x128xf32>
    %5 = vector.broadcast %4 : vector<1x128xf32> to vector<8x128xf32>
    %6 = arith.addf %3, %5 : vector<8x128xf32>
    %cst_5 = arith.constant 0.000000e+00 : f32
    %7 = vector.broadcast %cst_5 : f32 to vector<8x128xf32>
    %8 = arith.maximumf %6, %7 : vector<8x128xf32>
    %9 = arith.truncf %8 : vector<8x128xf32> to vector<8x128xbf16>
    %c0_6 = arith.constant 0 : index
    %c0_7 = arith.constant 0 : index
    %10 = vector.load %arg4[%c0_6, %c0_7] : memref<128x128xbf16, #tpu.memory_space<vmem>>, vector<128x128xbf16>
    %cst_8 = arith.constant dense<0.000000e+00> : vector<8x128xf32>
    %11 = tpu.matmul %9, %10, %cst_8 {dimension_numbers = #tpu.dot_dimension_numbers<[1], [0], [0], [1], [0, 0, 1, 1], [], []>} : vector<8x128xbf16>, vector<128x128xbf16>, vector<8x128xf32> -> vector<8x128xf32>
    %c0_9 = arith.constant 0 : index
    %c0_10 = arith.constant 0 : index
    %12 = vector.load %arg5[%c0_9, %c0_10] : memref<1x128xf32, #tpu.memory_space<vmem>>, vector<1x128xf32>
    %13 = vector.broadcast %12 : vector<1x128xf32> to vector<8x128xf32>
    %14 = arith.addf %11, %13 : vector<8x128xf32>
    %cst_11 = arith.constant 0.000000e+00 : f32
    %15 = vector.broadcast %cst_11 : f32 to vector<8x128xf32>
    %16 = arith.maximumf %14, %15 : vector<8x128xf32>
    %17 = arith.truncf %16 : vector<8x128xf32> to vector<8x128xbf16>
    %c0_12 = arith.constant 0 : index
    %c0_13 = arith.constant 0 : index
    %18 = vector.load %arg6[%c0_12, %c0_13] : memref<128x768xbf16, #tpu.memory_space<vmem>>, vector<128x768xbf16>
    %cst_14 = arith.constant dense<0.000000e+00> : vector<8x768xf32>
    %19 = tpu.matmul %17, %18, %cst_14 {dimension_numbers = #tpu.dot_dimension_numbers<[1], [0], [0], [1], [0, 0, 1, 1], [], []>} : vector<8x128xbf16>, vector<128x768xbf16>, vector<8x768xf32> -> vector<8x768xf32>
    %c0_15 = arith.constant 0 : index
    %c0_16 = arith.constant 0 : index
    %20 = vector.load %arg7[%c0_15, %c0_16] : memref<1x768xf32, #tpu.memory_space<vmem>>, vector<1x768xf32>
    %21 = vector.broadcast %20 : vector<1x768xf32> to vector<8x768xf32>
    %22 = arith.addf %19, %21 : vector<8x768xf32>
    %23 = math.tanh %22 : vector<8x768xf32>
    %24 = arith.truncf %23 : vector<8x768xf32> to vector<8x768xbf16>
    %c0_17 = arith.constant 0 : index
    %c0_18 = arith.constant 0 : index
    %25 = vector.load %arg8[%c0_17, %c0_18] : memref<8x768xbf16, #tpu.memory_space<vmem>>, vector<8x768xbf16>
    tpu.vector_store %arg8[%c0_17, %c0_18], %24 {strides = array<i32>} : memref<8x768xbf16, #tpu.memory_space<vmem>>, vector<8x768xbf16>,
    return
  }
  func.func @transform_0(%arg0: i32) -> (i32, i32) {
    %c0_i32 = arith.constant 0 : i32
    %c0_i32_0 = arith.constant 0 : i32
    return %arg0, %c0_i32 : i32, i32
  }
  func.func @transform_1(%arg0: i32) -> (i32, i32) {
    %c0_i32 = arith.constant 0 : i32
    %c0_i32_0 = arith.constant 0 : i32
    %c0_i32_1 = arith.constant 0 : i32
    return %c0_i32, %c0_i32_0 : i32, i32
  }
  func.func @transform_2(%arg0: i32) -> (i32, i32) {
    %c0_i32 = arith.constant 0 : i32
    %c0_i32_0 = arith.constant 0 : i32
    %c0_i32_1 = arith.constant 0 : i32
    return %c0_i32, %c0_i32_0 : i32, i32
  }
  func.func @transform_3(%arg0: i32) -> (i32, i32) {
    %c0_i32 = arith.constant 0 : i32
    %c0_i32_0 = arith.constant 0 : i32
    %c0_i32_1 = arith.constant 0 : i32
    return %c0_i32, %c0_i32_0 : i32, i32
  }
  func.func @transform_4(%arg0: i32) -> (i32, i32) {
    %c0_i32 = arith.constant 0 : i32
    %c0_i32_0 = arith.constant 0 : i32
    %c0_i32_1 = arith.constant 0 : i32
    return %c0_i32, %c0_i32_0 : i32, i32
  }
  func.func @transform_5(%arg0: i32) -> (i32, i32) {
    %c0_i32 = arith.constant 0 : i32
    %c0_i32_0 = arith.constant 0 : i32
    %c0_i32_1 = arith.constant 0 : i32
    return %c0_i32, %c0_i32_0 : i32, i32
  }
  func.func @transform_6(%arg0: i32) -> (i32, i32) {
    %c0_i32 = arith.constant 0 : i32
    %c0_i32_0 = arith.constant 0 : i32
    %c0_i32_1 = arith.constant 0 : i32
    return %c0_i32, %c0_i32_0 : i32, i32
  }
  func.func @transform_7(%arg0: i32) -> (i32, i32) {
    %c0_i32 = arith.constant 0 : i32
    %c0_i32_0 = arith.constant 0 : i32
    return %arg0, %c0_i32 : i32, i32
  }
}

</mosaic_0001>

<llo_original>
// kernel: fully_connected_forward.1
$region0: #{fully_connected_forward.1}
  #allocation0 [shape = 'u32[]', space=smem, size = 0x4, offset = 0x4, fixed_abs, tag = 'smem constant byte address 0x4 - core index']
  #allocation1 [shape = 'u32[144,128]{1,0:T(1,128)}', space=vmem, size = 0x12000, scoped, tag = 'internal scratch']
  %s0 = inlined_call_operand.vmem [shape: f32[8,1536], index: 0, kind: input, shape index: {}]
  %s1 = inlined_call_operand.hbm [shape: bf16[1536,128], index: 1, kind: input, shape index: {}]
  %s2 = inlined_call_operand.vmem [shape: f32[1,128], index: 2, kind: input, shape index: {}]
  %s3 = inlined_call_operand.vmem [shape: bf16[128,128], index: 3, kind: input, shape index: {}]
  %s4 = inlined_call_operand.vmem [shape: f32[1,128], index: 4, kind: input, shape index: {}]
  %s5 = inlined_call_operand.hbm [shape: bf16[128,768], index: 5, kind: input, shape index: {}]
  %s6 = inlined_call_operand.vmem [shape: f32[1,768], index: 6, kind: input, shape index: {}]
  %s7 = inlined_call_operand.vmem [shape: bf16[8,768], index: 7, kind: output, shape index: {}]
  %s8 = sld [smem:[#allocation0]]
  $region46: #{fully_connected_forward.1} parent=0
    _
  %s10 = ssub.s32 1, %s8
  %s11 = scalar_select 0, %s10, %s8
  $region1: #{fully_connected_forward.1} parent=0
    #allocation2 [shape = 'u8[393216]{0}', space=vmem, size = 0x60000, scoped, tag = 'input window, operand 1, single buffered']
    #allocation3 [shape = 's32[1]{0}', space=sflag, size = 0x4, scoped, tag = 'scoped memory for fully_connected_forward.1']
    #allocation4 [shape = 'u8[196608]{0}', space=vmem, size = 0x30000, scoped, tag = 'input window, operand 5, single buffered']
    #allocation5 [shape = 's32[1]{0}', space=sflag, size = 0x4, scoped, tag = 'scoped memory for fully_connected_forward.1']
    %12 = vsyncpa [#allocation3], 0
    %13 = vsyncpa [#allocation5], 0
    // Predicated region
    $region2: #{fully_connected_forward.1} parent=1 // pred_check
      _
    $region3: #{fully_connected_forward.1} parent=1 // pred_check_branch
      %15 = sbr.rel (0) target = $region5
    $region4: #{fully_connected_forward.1} parent=1 // pred_region
      _
    $region5: #{fully_connected_forward.1} parent=1 // pred_fallthru
      _
    // Predicated region
    $region6: #{fully_connected_forward.1} parent=1 // pred_check
      _
    $region7: #{fully_connected_forward.1} parent=1 // pred_check_branch
      %17 = sbr.rel (0) target = $region9
    $region8: #{fully_connected_forward.1} parent=1 // pred_region
      %s19 = ssub.s32 12288, 12288
      %20 = vsyncadd [#allocation3], %s19
      %s21 = sshll.u32 [#allocation2], 4
      %s22 = int_to_ptr.vmem [resolvable:$true] %s21
      %27 = dma.hbm_to_vmem [thread:$0]  %s1, 12288, %s22, [#allocation3], 64, 64, 4
    $region9: #{fully_connected_forward.1} parent=1 // pred_fallthru
      _
    // Predicated region
    $region10: #{fully_connected_forward.1} parent=1 // pred_check
      _
    $region11: #{fully_connected_forward.1} parent=1 // pred_check_branch
      %29 = sbr.rel (0) target = $region13
    $region12: #{fully_connected_forward.1} parent=1 // pred_region
      _
    $region13: #{fully_connected_forward.1} parent=1 // pred_fallthru
      _
    // Predicated region
    $region14: #{fully_connected_forward.1} parent=1 // pred_check
      _
    $region15: #{fully_connected_forward.1} parent=1 // pred_check_branch
      %31 = sbr.rel (0) target = $region17
    $region16: #{fully_connected_forward.1} parent=1 // pred_region
      _
    $region17: #{fully_connected_forward.1} parent=1 // pred_fallthru
      _
    // Predicated region
    $region18: #{fully_connected_forward.1} parent=1 // pred_check
      _
    $region19: #{fully_connected_forward.1} parent=1 // pred_check_branch
      %33 = sbr.rel (0) target = $region21
    $region20: #{fully_connected_forward.1} parent=1 // pred_region
      _
    $region21: #{fully_connected_forward.1} parent=1 // pred_fallthru
      _
    // Predicated region
    $region22: #{fully_connected_forward.1} parent=1 // pred_check
      _
    $region23: #{fully_connected_forward.1} parent=1 // pred_check_branch
      %35 = sbr.rel (0) target = $region25
    $region24: #{fully_connected_forward.1} parent=1 // pred_region
      %s37 = ssub.s32 6144, 6144
      %38 = vsyncadd [#allocation5], %s37
      %s39 = sshll.u32 [#allocation4], 4
      %s40 = int_to_ptr.vmem [resolvable:$true] %s39
      %45 = dma.hbm_to_vmem [thread:$0]  %s5, 6144, %s40, [#allocation5], 384, 384, 24
    $region25: #{fully_connected_forward.1} parent=1 // pred_fallthru
      _
    // Predicated region
    $region26: #{fully_connected_forward.1} parent=1 // pred_check
      _
    $region27: #{fully_connected_forward.1} parent=1 // pred_check_branch
      %47 = sbr.rel (0) target = $region29
    $region28: #{fully_connected_forward.1} parent=1 // pred_region
      _
    $region29: #{fully_connected_forward.1} parent=1 // pred_fallthru
      _
    // Predicated region
    $region30: #{fully_connected_forward.1} parent=1 // pred_check
      _
    $region31: #{fully_connected_forward.1} parent=1 // pred_check_branch
      %49 = sbr.rel (0) target = $region33
    $region32: #{fully_connected_forward.1} parent=1 // pred_region
      %50 = dma.done [#allocation3], 12288
    $region33: #{fully_connected_forward.1} parent=1 // pred_fallthru
      _
    // Predicated region
    $region34: #{fully_connected_forward.1} parent=1 // pred_check
      _
    $region35: #{fully_connected_forward.1} parent=1 // pred_check_branch
      %52 = sbr.rel (0) target = $region37
    $region36: #{fully_connected_forward.1} parent=1 // pred_region
      %53 = dma.done [#allocation5], 6144
    $region37: #{fully_connected_forward.1} parent=1 // pred_fallthru
      _
    %v55 = vld [vmem:[%s0] sm:$0xff]
    %v56 = vld [vmem:[%s0 + $0x8] sm:$0xff]
    %v57 = vld [vmem:[%s0 + $0x10] sm:$0xff]
    %v58 = vld [vmem:[%s0 + $0x18] sm:$0xff]
    %v59 = vld [vmem:[%s0 + $0x20] sm:$0xff]
    %v60 = vld [vmem:[%s0 + $0x28] sm:$0xff]
    %v61 = vld [vmem:[%s0 + $0x30] sm:$0xff]
    %v62 = vld [vmem:[%s0 + $0x38] sm:$0xff]
    %v63 = vld [vmem:[%s0 + $0x40] sm:$0xff]
    %v64 = vld [vmem:[%s0 + $0x48] sm:$0xff]
    %v65 = vld [vmem:[%s0 + $0x50] sm:$0xff]
    %v66 = vld [vmem:[%s0 + $0x58] sm:$0xff]
    %v67 = vpack.c.bf16 %v55, %v55
    %v68 = vpack.c.bf16 %v56, %v56
    %v69 = vpack.c.bf16 %v57, %v57
    %v70 = vpack.c.bf16 %v58, %v58
    %v71 = vpack.c.bf16 %v59, %v59
    %v72 = vpack.c.bf16 %v60, %v60
    %v73 = vpack.c.bf16 %v61, %v61
    %v74 = vpack.c.bf16 %v62, %v62
    %v75 = vpack.c.bf16 %v63, %v63
    %v76 = vpack.c.bf16 %v64, %v64
    %v77 = vpack.c.bf16 %v65, %v65
    %v78 = vpack.c.bf16 %v66, %v66
    %v79 = vld [vmem:[#allocation2] sm:$0xf]
    %v80 = vld [vmem:[#allocation2 + $0x4] sm:$0xf]
    %v81 = vld [vmem:[#allocation2 + $0x8] sm:$0xf]
    %v82 = vld [vmem:[#allocation2 + $0xc] sm:$0xf]
    %v83 = vld [vmem:[#allocation2 + $0x10] sm:$0xf]
    %v84 = vld [vmem:[#allocation2 + $0x14] sm:$0xf]
    %v85 = vld [vmem:[#allocation2 + $0x18] sm:$0xf]
    %v86 = vld [vmem:[#allocation2 + $0x1c] sm:$0xf]
    %v87 = vld [vmem:[#allocation2 + $0x20] sm:$0xf]
    %v88 = vld [vmem:[#allocation2 + $0x24] sm:$0xf]
    %v89 = vld [vmem:[#allocation2 + $0x28] sm:$0xf]
    %v90 = vld [vmem:[#allocation2 + $0x2c] sm:$0xf]
    %v91 = vld [vmem:[#allocation2 + $0x30] sm:$0xf]
    %v92 = vld [vmem:[#allocation2 + $0x34] sm:$0xf]
    %v93 = vld [vmem:[#allocation2 + $0x38] sm:$0xf]
    %v94 = vld [vmem:[#allocation2 + $0x3c] sm:$0xf]
    %v95 = vld [vmem:[#allocation2 + $0x40] sm:$0xf]
    %v96 = vld [vmem:[#allocation2 + $0x44] sm:$0xf]
    %v97 = vld [vmem:[#allocation2 + $0x48] sm:$0xf]
    %v98 = vld [vmem:[#allocation2 + $0x4c] sm:$0xf]
    %v99 = vld [vmem:[#allocation2 + $0x50] sm:$0xf]
    %v100 = vld [vmem:[#allocation2 + $0x54] sm:$0xf]
    %v101 = vld [vmem:[#allocation2 + $0x58] sm:$0xf]
    %v102 = vld [vmem:[#allocation2 + $0x5c] sm:$0xf]
    %v103 = vld [vmem:[#allocation2 + $0x60] sm:$0xf]
    %v104 = vld [vmem:[#allocation2 + $0x64] sm:$0xf]
    %v105 = vld [vmem:[#allocation2 + $0x68] sm:$0xf]
    %v106 = vld [vmem:[#allocation2 + $0x6c] sm:$0xf]
    %v107 = vld [vmem:[#allocation2 + $0x70] sm:$0xf]
    %v108 = vld [vmem:[#allocation2 + $0x74] sm:$0xf]
    %v109 = vld [vmem:[#allocation2 + $0x78] sm:$0xf]
    %v110 = vld [vmem:[#allocation2 + $0x7c] sm:$0xf]
    %v111 = vld [vmem:[#allocation2 + $0x80] sm:$0xf]
    %v112 = vld [vmem:[#allocation2 + $0x84] sm:$0xf]
    %v113 = vld [vmem:[#allocation2 + $0x88] sm:$0xf]
    %v114 = vld [vmem:[#allocation2 + $0x8c] sm:$0xf]
    %v115 = vld [vmem:[#allocation2 + $0x90] sm:$0xf]
    %v116 = vld [vmem:[#allocation2 + $0x94] sm:$0xf]
    %v117 = vld [vmem:[#allocation2 + $0x98] sm:$0xf]
    %v118 = vld [vmem:[#allocation2 + $0x9c] sm:$0xf]
    %v119 = vld [vmem:[#allocation2 + $0xa0] sm:$0xf]
    %v120 = vld [vmem:[#allocation2 + $0xa4] sm:$0xf]
    %v121 = vld [vmem:[#allocation2 + $0xa8] sm:$0xf]
    %v122 = vld [vmem:[#allocation2 + $0xac] sm:$0xf]
    %v123 = vld [vmem:[#allocation2 + $0xb0] sm:$0xf]
    %v124 = vld [vmem:[#allocation2 + $0xb4] sm:$0xf]
    %v125 = vld [vmem:[#allocation2 + $0xb8] sm:$0xf]
    %v126 = vld [vmem:[#allocation2 + $0xbc] sm:$0xf]
    %v127 = vld [vmem:[#allocation2 + $0xc0] sm:$0xf]
    %v128 = vld [vmem:[#allocation2 + $0xc4] sm:$0xf]
    %v129 = vld [vmem:[#allocation2 + $0xc8] sm:$0xf]
    %v130 = vld [vmem:[#allocation2 + $0xcc] sm:$0xf]
    %v131 = vld [vmem:[#allocation2 + $0xd0] sm:$0xf]
    %v132 = vld [vmem:[#allocation2 + $0xd4] sm:$0xf]
    %v133 = vld [vmem:[#allocation2 + $0xd8] sm:$0xf]
    %v134 = vld [vmem:[#allocation2 + $0xdc] sm:$0xf]
    %v135 = vld [vmem:[#allocation2 + $0xe0] sm:$0xf]
    %v136 = vld [vmem:[#allocation2 + $0xe4] sm:$0xf]
    %v137 = vld [vmem:[#allocation2 + $0xe8] sm:$0xf]
    %v138 = vld [vmem:[#allocation2 + $0xec] sm:$0xf]
    %v139 = vld [vmem:[#allocation2 + $0xf0] sm:$0xf]
    %v140 = vld [vmem:[#allocation2 + $0xf4] sm:$0xf]
    %v141 = vld [vmem:[#allocation2 + $0xf8] sm:$0xf]
    %v142 = vld [vmem:[#allocation2 + $0xfc] sm:$0xf]
    %v143 = vld [vmem:[#allocation2 + $0x100] sm:$0xf]
    %v144 = vld [vmem:[#allocation2 + $0x104] sm:$0xf]
    %v145 = vld [vmem:[#allocation2 + $0x108] sm:$0xf]
    %v146 = vld [vmem:[#allocation2 + $0x10c] sm:$0xf]
    %v147 = vld [vmem:[#allocation2 + $0x110] sm:$0xf]
    %v148 = vld [vmem:[#allocation2 + $0x114] sm:$0xf]
    %v149 = vld [vmem:[#allocation2 + $0x118] sm:$0xf]
    %v150 = vld [vmem:[#allocation2 + $0x11c] sm:$0xf]
    %v151 = vld [vmem:[#allocation2 + $0x120] sm:$0xf]
    %v152 = vld [vmem:[#allocation2 + $0x124] sm:$0xf]
    %v153 = vld [vmem:[#allocation2 + $0x128] sm:$0xf]
    %v154 = vld [vmem:[#allocation2 + $0x12c] sm:$0xf]
    %v155 = vld [vmem:[#allocation2 + $0x130] sm:$0xf]
    %v156 = vld [vmem:[#allocation2 + $0x134] sm:$0xf]
    %v157 = vld [vmem:[#allocation2 + $0x138] sm:$0xf]
    %v158 = vld [vmem:[#allocation2 + $0x13c] sm:$0xf]
    %v159 = vld [vmem:[#allocation2 + $0x140] sm:$0xf]
    %v160 = vld [vmem:[#allocation2 + $0x144] sm:$0xf]
    %v161 = vld [vmem:[#allocation2 + $0x148] sm:$0xf]
    %v162 = vld [vmem:[#allocation2 + $0x14c] sm:$0xf]
    %v163 = vld [vmem:[#allocation2 + $0x150] sm:$0xf]
    %v164 = vld [vmem:[#allocation2 + $0x154] sm:$0xf]
    %v165 = vld [vmem:[#allocation2 + $0x158] sm:$0xf]
    %v166 = vld [vmem:[#allocation2 + $0x15c] sm:$0xf]
    %v167 = vld [vmem:[#allocation2 + $0x160] sm:$0xf]
    %v168 = vld [vmem:[#allocation2 + $0x164] sm:$0xf]
    %v169 = vld [vmem:[#allocation2 + $0x168] sm:$0xf]
    %v170 = vld [vmem:[#allocation2 + $0x16c] sm:$0xf]
    %v171 = vld [vmem:[#allocation2 + $0x170] sm:$0xf]
    %v172 = vld [vmem:[#allocation2 + $0x174] sm:$0xf]
    %v173 = vld [vmem:[#allocation2 + $0x178] sm:$0xf]
    %v174 = vld [vmem:[#allocation2 + $0x17c] sm:$0xf]
    %v175 = vld [vmem:[#allocation2 + $0x180] sm:$0xf]
    %v176 = vld [vmem:[#allocation2 + $0x184] sm:$0xf]
    %v177 = vld [vmem:[#allocation2 + $0x188] sm:$0xf]
    %v178 = vld [vmem:[#allocation2 + $0x18c] sm:$0xf]
    %v179 = vld [vmem:[#allocation2 + $0x190] sm:$0xf]
    %v180 = vld [vmem:[#allocation2 + $0x194] sm:$0xf]
    %v181 = vld [vmem:[#allocation2 + $0x198] sm:$0xf]
    %v182 = vld [vmem:[#allocation2 + $0x19c] sm:$0xf]
    %v183 = vld [vmem:[#allocation2 + $0x1a0] sm:$0xf]
    %v184 = vld [vmem:[#allocation2 + $0x1a4] sm:$0xf]
    %v185 = vld [vmem:[#allocation2 + $0x1a8] sm:$0xf]
    %v186 = vld [vmem:[#allocation2 + $0x1ac] sm:$0xf]
    %v187 = vld [vmem:[#allocation2 + $0x1b0] sm:$0xf]
    %v188 = vld [vmem:[#allocation2 + $0x1b4] sm:$0xf]
    %v189 = vld [vmem:[#allocation2 + $0x1b8] sm:$0xf]
    %v190 = vld [vmem:[#allocation2 + $0x1bc] sm:$0xf]
    %v191 = vld [vmem:[#allocation2 + $0x1c0] sm:$0xf]
    %v192 = vld [vmem:[#allocation2 + $0x1c4] sm:$0xf]
    %v193 = vld [vmem:[#allocation2 + $0x1c8] sm:$0xf]
    %v194 = vld [vmem:[#allocation2 + $0x1cc] sm:$0xf]
    %v195 = vld [vmem:[#allocation2 + $0x1d0] sm:$0xf]
    %v196 = vld [vmem:[#allocation2 + $0x1d4] sm:$0xf]
    %v197 = vld [vmem:[#allocation2 + $0x1d8] sm:$0xf]
    %v198 = vld [vmem:[#allocation2 + $0x1dc] sm:$0xf]
    %v199 = vld [vmem:[#allocation2 + $0x1e0] sm:$0xf]
    %v200 = vld [vmem:[#allocation2 + $0x1e4] sm:$0xf]
    %v201 = vld [vmem:[#allocation2 + $0x1e8] sm:$0xf]
    %v202 = vld [vmem:[#allocation2 + $0x1ec] sm:$0xf]
    %v203 = vld [vmem:[#allocation2 + $0x1f0] sm:$0xf]
    %v204 = vld [vmem:[#allocation2 + $0x1f4] sm:$0xf]
    %v205 = vld [vmem:[#allocation2 + $0x1f8] sm:$0xf]
    %v206 = vld [vmem:[#allocation2 + $0x1fc] sm:$0xf]
    %v207 = vld [vmem:[#allocation2 + $0x200] sm:$0xf]
    %v208 = vld [vmem:[#allocation2 + $0x204] sm:$0xf]
    %v209 = vld [vmem:[#allocation2 + $0x208] sm:$0xf]
    %v210 = vld [vmem:[#allocation2 + $0x20c] sm:$0xf]
    %v211 = vld [vmem:[#allocation2 + $0x210] sm:$0xf]
    %v212 = vld [vmem:[#allocation2 + $0x214] sm:$0xf]
    %v213 = vld [vmem:[#allocation2 + $0x218] sm:$0xf]
    %v214 = vld [vmem:[#allocation2 + $0x21c] sm:$0xf]
    %v215 = vld [vmem:[#allocation2 + $0x220] sm:$0xf]
    %v216 = vld [vmem:[#allocation2 + $0x224] sm:$0xf]
    %v217 = vld [vmem:[#allocation2 + $0x228] sm:$0xf]
    %v218 = vld [vmem:[#allocation2 + $0x22c] sm:$0xf]
    %v219 = vld [vmem:[#allocation2 + $0x230] sm:$0xf]
    %v220 = vld [vmem:[#allocation2 + $0x234] sm:$0xf]
    %v221 = vld [vmem:[#allocation2 + $0x238] sm:$0xf]
    %v222 = vld [vmem:[#allocation2 + $0x23c] sm:$0xf]
    %v223 = vld [vmem:[#allocation2 + $0x240] sm:$0xf]
    %v224 = vld [vmem:[#allocation2 + $0x244] sm:$0xf]
    %v225 = vld [vmem:[#allocation2 + $0x248] sm:$0xf]
    %v226 = vld [vmem:[#allocation2 + $0x24c] sm:$0xf]
    %v227 = vld [vmem:[#allocation2 + $0x250] sm:$0xf]
    %v228 = vld [vmem:[#allocation2 + $0x254] sm:$0xf]
    %v229 = vld [vmem:[#allocation2 + $0x258] sm:$0xf]
    %v230 = vld [vmem:[#allocation2 + $0x25c] sm:$0xf]
    %v231 = vld [vmem:[#allocation2 + $0x260] sm:$0xf]
    %v232 = vld [vmem:[#allocation2 + $0x264] sm:$0xf]
    %v233 = vld [vmem:[#allocation2 + $0x268] sm:$0xf]
    %v234 = vld [vmem:[#allocation2 + $0x26c] sm:$0xf]
    %v235 = vld [vmem:[#allocation2 + $0x270] sm:$0xf]
    %v236 = vld [vmem:[#allocation2 + $0x274] sm:$0xf]
    %v237 = vld [vmem:[#allocation2 + $0x278] sm:$0xf]
    %v238 = vld [vmem:[#allocation2 + $0x27c] sm:$0xf]
    %v239 = vld [vmem:[#allocation2 + $0x280] sm:$0xf]
    %v240 = vld [vmem:[#allocation2 + $0x284] sm:$0xf]
    %v241 = vld [vmem:[#allocation2 + $0x288] sm:$0xf]
    %v242 = vld [vmem:[#allocation2 + $0x28c] sm:$0xf]
    %v243 = vld [vmem:[#allocation2 + $0x290] sm:$0xf]
    %v244 = vld [vmem:[#allocation2 + $0x294] sm:$0xf]
    %v245 = vld [vmem:[#allocation2 + $0x298] sm:$0xf]
    %v246 = vld [vmem:[#allocation2 + $0x29c] sm:$0xf]
    %v247 = vld [vmem:[#allocation2 + $0x2a0] sm:$0xf]
    %v248 = vld [vmem:[#allocation2 + $0x2a4] sm:$0xf]
    %v249 = vld [vmem:[#allocation2 + $0x2a8] sm:$0xf]
    %v250 = vld [vmem:[#allocation2 + $0x2ac] sm:$0xf]
    %v251 = vld [vmem:[#allocation2 + $0x2b0] sm:$0xf]
    %v252 = vld [vmem:[#allocation2 + $0x2b4] sm:$0xf]
    %v253 = vld [vmem:[#allocation2 + $0x2b8] sm:$0xf]
    %v254 = vld [vmem:[#allocation2 + $0x2bc] sm:$0xf]
    %v255 = vld [vmem:[#allocation2 + $0x2c0] sm:$0xf]
    %v256 = vld [vmem:[#allocation2 + $0x2c4] sm:$0xf]
    %v257 = vld [vmem:[#allocation2 + $0x2c8] sm:$0xf]
    %v258 = vld [vmem:[#allocation2 + $0x2cc] sm:$0xf]
    %v259 = vld [vmem:[#allocation2 + $0x2d0] sm:$0xf]
    %v260 = vld [vmem:[#allocation2 + $0x2d4] sm:$0xf]
    %v261 = vld [vmem:[#allocation2 + $0x2d8] sm:$0xf]
    %v262 = vld [vmem:[#allocation2 + $0x2dc] sm:$0xf]
    %v263 = vld [vmem:[#allocation2 + $0x2e0] sm:$0xf]
    %v264 = vld [vmem:[#allocation2 + $0x2e4] sm:$0xf]
    %v265 = vld [vmem:[#allocation2 + $0x2e8] sm:$0xf]
    %v266 = vld [vmem:[#allocation2 + $0x2ec] sm:$0xf]
    %v267 = vld [vmem:[#allocation2 + $0x2f0] sm:$0xf]
    %v268 = vld [vmem:[#allocation2 + $0x2f4] sm:$0xf]
    %v269 = vld [vmem:[#allocation2 + $0x2f8] sm:$0xf]
    %v270 = vld [vmem:[#allocation2 + $0x2fc] sm:$0xf]
    %v271 = vld [vmem:[%s2] sm:$0x1]
    %v273 = vlaneseq
    %v274 = vshrl.u32 %v273, 7
    %v275 = vsub.s32 0, %v274
    %v276 = vrot.slane %v271, %v275
    %v470 = vunpack.c.l.b16 %v79
    %v471 = vunpack.c.l.b16 %v80
    %v472 = vunpack.c.l.b16 %v81
    %v473 = vunpack.c.l.b16 %v82
    %v474 = vunpack.c.l.b16 %v83
    %v475 = vunpack.c.l.b16 %v84
    %v476 = vunpack.c.l.b16 %v85
    %v477 = vunpack.c.l.b16 %v86
    %v478 = vunpack.c.l.b16 %v87
    %v479 = vunpack.c.l.b16 %v88
    %v480 = vunpack.c.l.b16 %v89
    %v481 = vunpack.c.l.b16 %v90
    %v482 = vunpack.c.l.b16 %v91
    %v483 = vunpack.c.l.b16 %v92
    %v484 = vunpack.c.l.b16 %v93
    %v485 = vunpack.c.l.b16 %v94
    %v486 = vunpack.c.l.b16 %v95
    %v487 = vunpack.c.l.b16 %v96
    %v488 = vunpack.c.l.b16 %v97
    %v489 = vunpack.c.l.b16 %v98
    %v490 = vunpack.c.l.b16 %v99
    %v491 = vunpack.c.l.b16 %v100
    %v492 = vunpack.c.l.b16 %v101
    %v493 = vunpack.c.l.b16 %v102
    %v494 = vunpack.c.l.b16 %v103
    %v495 = vunpack.c.l.b16 %v104
    %v496 = vunpack.c.l.b16 %v105
    %v497 = vunpack.c.l.b16 %v106
    %v498 = vunpack.c.l.b16 %v107
    %v499 = vunpack.c.l.b16 %v108
    %v500 = vunpack.c.l.b16 %v109
    %v501 = vunpack.c.l.b16 %v110
    %v502 = vunpack.c.l.b16 %v111
    %v503 = vunpack.c.l.b16 %v112
    %v504 = vunpack.c.l.b16 %v113
    %v505 = vunpack.c.l.b16 %v114
    %v506 = vunpack.c.l.b16 %v115
    %v507 = vunpack.c.l.b16 %v116
    %v508 = vunpack.c.l.b16 %v117
    %v509 = vunpack.c.l.b16 %v118
    %v510 = vunpack.c.l.b16 %v119
    %v511 = vunpack.c.l.b16 %v120
    %v512 = vunpack.c.l.b16 %v121
    %v513 = vunpack.c.l.b16 %v122
    %v514 = vunpack.c.l.b16 %v123
    %v515 = vunpack.c.l.b16 %v124
    %v516 = vunpack.c.l.b16 %v125
    %v517 = vunpack.c.l.b16 %v126
    %v518 = vunpack.c.l.b16 %v127
    %v519 = vunpack.c.l.b16 %v128
    %v520 = vunpack.c.l.b16 %v129
    %v521 = vunpack.c.l.b16 %v130
    %v522 = vunpack.c.l.b16 %v131
    %v523 = vunpack.c.l.b16 %v132
    %v524 = vunpack.c.l.b16 %v133
    %v525 = vunpack.c.l.b16 %v134
    %v526 = vunpack.c.l.b16 %v135
    %v527 = vunpack.c.l.b16 %v136
    %v528 = vunpack.c.l.b16 %v137
    %v529 = vunpack.c.l.b16 %v138
    %v530 = vunpack.c.l.b16 %v139
    %v531 = vunpack.c.l.b16 %v140
    %v532 = vunpack.c.l.b16 %v141
    %v533 = vunpack.c.l.b16 %v142
    %v534 = vunpack.c.l.b16 %v143
    %v535 = vunpack.c.l.b16 %v144
    %v536 = vunpack.c.l.b16 %v145
    %v537 = vunpack.c.l.b16 %v146
    %v538 = vunpack.c.l.b16 %v147
    %v539 = vunpack.c.l.b16 %v148
    %v540 = vunpack.c.l.b16 %v149
    %v541 = vunpack.c.l.b16 %v150
    %v542 = vunpack.c.l.b16 %v151
    %v543 = vunpack.c.l.b16 %v152
    %v544 = vunpack.c.l.b16 %v153
    %v545 = vunpack.c.l.b16 %v154
    %v546 = vunpack.c.l.b16 %v155
    %v547 = vunpack.c.l.b16 %v156
    %v548 = vunpack.c.l.b16 %v157
    %v549 = vunpack.c.l.b16 %v158
    %v550 = vunpack.c.l.b16 %v159
    %v551 = vunpack.c.l.b16 %v160
    %v552 = vunpack.c.l.b16 %v161
    %v553 = vunpack.c.l.b16 %v162
    %v554 = vunpack.c.l.b16 %v163
    %v555 = vunpack.c.l.b16 %v164
    %v556 = vunpack.c.l.b16 %v165
    %v557 = vunpack.c.l.b16 %v166
    %v558 = vunpack.c.l.b16 %v167
    %v559 = vunpack.c.l.b16 %v168
    %v560 = vunpack.c.l.b16 %v169
    %v561 = vunpack.c.l.b16 %v170
    %v562 = vunpack.c.l.b16 %v171
    %v563 = vunpack.c.l.b16 %v172
    %v564 = vunpack.c.l.b16 %v173
    %v565 = vunpack.c.l.b16 %v174
    %v566 = vunpack.c.l.b16 %v175
    %v567 = vunpack.c.l.b16 %v176
    %v568 = vunpack.c.l.b16 %v177
    %v569 = vunpack.c.l.b16 %v178
    %v570 = vunpack.c.l.b16 %v179
    %v571 = vunpack.c.l.b16 %v180
    %v572 = vunpack.c.l.b16 %v181
    %v573 = vunpack.c.l.b16 %v182
    %v574 = vunpack.c.l.b16 %v183
    %v575 = vunpack.c.l.b16 %v184
    %v576 = vunpack.c.l.b16 %v185
    %v577 = vunpack.c.l.b16 %v186
    %v578 = vunpack.c.l.b16 %v187
    %v579 = vunpack.c.l.b16 %v188
    %v580 = vunpack.c.l.b16 %v189
    %v581 = vunpack.c.l.b16 %v190
    %v582 = vunpack.c.l.b16 %v191
    %v583 = vunpack.c.l.b16 %v192
    %v584 = vunpack.c.l.b16 %v193
    %v585 = vunpack.c.l.b16 %v194
    %v586 = vunpack.c.l.b16 %v195
    %v587 = vunpack.c.l.b16 %v196
    %v588 = vunpack.c.l.b16 %v197
    %v589 = vunpack.c.l.b16 %v198
    %v590 = vunpack.c.l.b16 %v199
    %v591 = vunpack.c.l.b16 %v200
    %v592 = vunpack.c.l.b16 %v201
    %v593 = vunpack.c.l.b16 %v202
    %v594 = vunpack.c.l.b16 %v203
    %v595 = vunpack.c.l.b16 %v204
    %v596 = vunpack.c.l.b16 %v205
    %v597 = vunpack.c.l.b16 %v206
    %v598 = vunpack.c.l.b16 %v207
    %v599 = vunpack.c.l.b16 %v208
    %v600 = vunpack.c.l.b16 %v209
    %v601 = vunpack.c.l.b16 %v210
    %v602 = vunpack.c.l.b16 %v211
    %v603 = vunpack.c.l.b16 %v212
    %v604 = vunpack.c.l.b16 %v213
    %v605 = vunpack.c.l.b16 %v214
    %v606 = vunpack.c.l.b16 %v215
    %v607 = vunpack.c.l.b16 %v216
    %v608 = vunpack.c.l.b16 %v217
    %v609 = vunpack.c.l.b16 %v218
    %v610 = vunpack.c.l.b16 %v219
    %v611 = vunpack.c.l.b16 %v220
    %v612 = vunpack.c.l.b16 %v221
    %v613 = vunpack.c.l.b16 %v222
    %v614 = vunpack.c.l.b16 %v223
    %v615 = vunpack.c.l.b16 %v224
    %v616 = vunpack.c.l.b16 %v225
    %v617 = vunpack.c.l.b16 %v226
    %v618 = vunpack.c.l.b16 %v227
    %v619 = vunpack.c.l.b16 %v228
    %v620 = vunpack.c.l.b16 %v229
    %v621 = vunpack.c.l.b16 %v230
    %v622 = vunpack.c.l.b16 %v231
    %v623 = vunpack.c.l.b16 %v232
    %v624 = vunpack.c.l.b16 %v233
    %v625 = vunpack.c.l.b16 %v234
    %v626 = vunpack.c.l.b16 %v235
    %v627 = vunpack.c.l.b16 %v236
    %v628 = vunpack.c.l.b16 %v237
    %v629 = vunpack.c.l.b16 %v238
    %v630 = vunpack.c.l.b16 %v239
    %v631 = vunpack.c.l.b16 %v240
    %v632 = vunpack.c.l.b16 %v241
    %v633 = vunpack.c.l.b16 %v242
    %v634 = vunpack.c.l.b16 %v243
    %v635 = vunpack.c.l.b16 %v244
    %v636 = vunpack.c.l.b16 %v245
    %v637 = vunpack.c.l.b16 %v246
    %v638 = vunpack.c.l.b16 %v247
    %v639 = vunpack.c.l.b16 %v248
    %v640 = vunpack.c.l.b16 %v249
    %v641 = vunpack.c.l.b16 %v250
    %v642 = vunpack.c.l.b16 %v251
    %v643 = vunpack.c.l.b16 %v252
    %v644 = vunpack.c.l.b16 %v253
    %v645 = vunpack.c.l.b16 %v254
    %v646 = vunpack.c.l.b16 %v255
    %v647 = vunpack.c.l.b16 %v256
    %v648 = vunpack.c.l.b16 %v257
    %v649 = vunpack.c.l.b16 %v258
    %v650 = vunpack.c.l.b16 %v259
    %v651 = vunpack.c.l.b16 %v260
    %v652 = vunpack.c.l.b16 %v261
    %v653 = vunpack.c.l.b16 %v262
    %v654 = vunpack.c.l.b16 %v263
    %v655 = vunpack.c.l.b16 %v264
    %v656 = vunpack.c.l.b16 %v265
    %v657 = vunpack.c.l.b16 %v266
    %v658 = vunpack.c.l.b16 %v267
    %v659 = vunpack.c.l.b16 %v268
    %v660 = vunpack.c.l.b16 %v269
    %v661 = vunpack.c.l.b16 %v270
    %v662 = vpack.c.b16 %v471, %v470
    %v663 = vpack.c.b16 %v473, %v472
    %v664 = vpack.c.b16 %v475, %v474
    %v665 = vpack.c.b16 %v477, %v476
    %v666 = vpack.c.b16 %v479, %v478
    %v667 = vpack.c.b16 %v481, %v480
    %v668 = vpack.c.b16 %v483, %v482
    %v669 = vpack.c.b16 %v485, %v484
    %v670 = vpack.c.b16 %v487, %v486
    %v671 = vpack.c.b16 %v489, %v488
    %v672 = vpack.c.b16 %v491, %v490
    %v673 = vpack.c.b16 %v493, %v492
    %v674 = vpack.c.b16 %v495, %v494
    %v675 = vpack.c.b16 %v497, %v496
    %v676 = vpack.c.b16 %v499, %v498
    %v677 = vpack.c.b16 %v501, %v500
    %v678 = vpack.c.b16 %v503, %v502
    %v679 = vpack.c.b16 %v505, %v504
    %v680 = vpack.c.b16 %v507, %v506
    %v681 = vpack.c.b16 %v509, %v508
    %v682 = vpack.c.b16 %v511, %v510
    %v683 = vpack.c.b16 %v513, %v512
    %v684 = vpack.c.b16 %v515, %v514
    %v685 = vpack.c.b16 %v517, %v516
    %v686 = vpack.c.b16 %v519, %v518
    %v687 = vpack.c.b16 %v521, %v520
    %v688 = vpack.c.b16 %v523, %v522
    %v689 = vpack.c.b16 %v525, %v524
    %v690 = vpack.c.b16 %v527, %v526
    %v691 = vpack.c.b16 %v529, %v528
    %v692 = vpack.c.b16 %v531, %v530
    %v693 = vpack.c.b16 %v533, %v532
    %v694 = vpack.c.b16 %v535, %v534
    %v695 = vpack.c.b16 %v537, %v536
    %v696 = vpack.c.b16 %v539, %v538
    %v697 = vpack.c.b16 %v541, %v540
    %v698 = vpack.c.b16 %v543, %v542
    %v699 = vpack.c.b16 %v545, %v544
    %v700 = vpack.c.b16 %v547, %v546
    %v701 = vpack.c.b16 %v549, %v548
    %v702 = vpack.c.b16 %v551, %v550
    %v703 = vpack.c.b16 %v553, %v552
    %v704 = vpack.c.b16 %v555, %v554
    %v705 = vpack.c.b16 %v557, %v556
    %v706 = vpack.c.b16 %v559, %v558
    %v707 = vpack.c.b16 %v561, %v560
    %v708 = vpack.c.b16 %v563, %v562
    %v709 = vpack.c.b16 %v565, %v564
    %v710 = vpack.c.b16 %v567, %v566
    %v711 = vpack.c.b16 %v569, %v568
    %v712 = vpack.c.b16 %v571, %v570
    %v713 = vpack.c.b16 %v573, %v572
    %v714 = vpack.c.b16 %v575, %v574
    %v715 = vpack.c.b16 %v577, %v576
    %v716 = vpack.c.b16 %v579, %v578
    %v717 = vpack.c.b16 %v581, %v580
    %v718 = vpack.c.b16 %v583, %v582
    %v719 = vpack.c.b16 %v585, %v584
    %v720 = vpack.c.b16 %v587, %v586
    %v721 = vpack.c.b16 %v589, %v588
    %v722 = vpack.c.b16 %v591, %v590
    %v723 = vpack.c.b16 %v593, %v592
    %v724 = vpack.c.b16 %v595, %v594
    %v725 = vpack.c.b16 %v597, %v596
    %v726 = vpack.c.b16 %v599, %v598
    %v727 = vpack.c.b16 %v601, %v600
    %v728 = vpack.c.b16 %v603, %v602
    %v729 = vpack.c.b16 %v605, %v604
    %v730 = vpack.c.b16 %v607, %v606
    %v731 = vpack.c.b16 %v609, %v608
    %v732 = vpack.c.b16 %v611, %v610
    %v733 = vpack.c.b16 %v613, %v612
    %v734 = vpack.c.b16 %v615, %v614
    %v735 = vpack.c.b16 %v617, %v616
    %v736 = vpack.c.b16 %v619, %v618
    %v737 = vpack.c.b16 %v621, %v620
    %v738 = vpack.c.b16 %v623, %v622
    %v739 = vpack.c.b16 %v625, %v624
    %v740 = vpack.c.b16 %v627, %v626
    %v741 = vpack.c.b16 %v629, %v628
    %v742 = vpack.c.b16 %v631, %v630
    %v743 = vpack.c.b16 %v633, %v632
    %v744 = vpack.c.b16 %v635, %v634
    %v745 = vpack.c.b16 %v637, %v636
    %v746 = vpack.c.b16 %v639, %v638
    %v747 = vpack.c.b16 %v641, %v640
    %v748 = vpack.c.b16 %v643, %v642
    %v749 = vpack.c.b16 %v645, %v644
    %v750 = vpack.c.b16 %v647, %v646
    %v751 = vpack.c.b16 %v649, %v648
    %v752 = vpack.c.b16 %v651, %v650
    %v753 = vpack.c.b16 %v653, %v652
    %v754 = vpack.c.b16 %v655, %v654
    %v755 = vpack.c.b16 %v657, %v656
    %v756 = vpack.c.b16 %v659, %v658
    %v757 = vpack.c.b16 %v661, %v660
    %854 = vmatprep.subr.bf16.mxu0 0
    %855 = vmatpush1.bf16.msra.mxu0 %v662
    %856 = vmatprep.subr.bf16.mxu0 0
    %857 = vmatpush1.bf16.msra.mxu0 %v663
    %858 = vmatprep.subr.bf16.mxu0 0
    %859 = vmatpush1.bf16.msra.mxu0 %v664
    %860 = vmatprep.subr.bf16.mxu0 0
    %861 = vmatpush1.bf16.msra.mxu0 %v665
    %862 = vmatprep.subr.bf16.mxu0 0
    %863 = vmatpush1.bf16.msra.mxu0 %v666
    %864 = vmatprep.subr.bf16.mxu0 0
    %865 = vmatpush1.bf16.msra.mxu0 %v667
    %866 = vmatprep.subr.bf16.mxu0 0
    %867 = vmatpush1.bf16.msra.mxu0 %v668
    %868 = vmatprep.subr.bf16.mxu0 0
    %869 = vmatpush1.bf16.msra.mxu0 %v669
    %870 = vmatprep.subr.bf16.mxu0 0
    %871 = vmatpush1.bf16.msra.mxu0 %v670
    %872 = vmatprep.subr.bf16.mxu0 0
    %873 = vmatpush1.bf16.msra.mxu0 %v671
    %874 = vmatprep.subr.bf16.mxu0 0
    %875 = vmatpush1.bf16.msra.mxu0 %v672
    %876 = vmatprep.subr.bf16.mxu0 0
    %877 = vmatpush1.bf16.msra.mxu0 %v673
    %878 = vmatprep.subr.bf16.mxu0 0
    %879 = vmatpush1.bf16.msra.mxu0 %v674
    %880 = vmatprep.subr.bf16.mxu0 0
    %881 = vmatpush1.bf16.msra.mxu0 %v675
    %882 = vmatprep.subr.bf16.mxu0 0
    %883 = vmatpush1.bf16.msra.mxu0 %v676
    %884 = vmatprep.subr.bf16.mxu0 0
    %885 = vmatpush1.bf16.msra.mxu0 %v677
    %886 = vmatprep.mubr.bf16.mxu0 %v68
    %887 = vmatmul.mubr.bf16.gmra.mrb[0].mxu0 %v67
    %v888 = vpop.f32.mrb[0].mxu0
    %v889 = vadd.f32 %v276, %v888
    %v890 = vpop.f32.mrb[0].mxu0
    %v891 = vpop.f32.mrb[0].mxu0
    %v892 = vpop.f32.mrb[0].mxu0
    %893 = vdwg.mxu0
    %894 = vmatprep.subr.bf16.mxu0 0
    %895 = vmatpush1.bf16.msra.mxu0 %v678
    %896 = vmatprep.subr.bf16.mxu0 0
    %897 = vmatpush1.bf16.msra.mxu0 %v679
    %898 = vmatprep.subr.bf16.mxu0 0
    %899 = vmatpush1.bf16.msra.mxu0 %v680
    %900 = vmatprep.subr.bf16.mxu0 0
    %901 = vmatpush1.bf16.msra.mxu0 %v681
    %902 = vmatprep.subr.bf16.mxu0 0
    %903 = vmatpush1.bf16.msra.mxu0 %v682
    %904 = vmatprep.subr.bf16.mxu0 0
    %905 = vmatpush1.bf16.msra.mxu0 %v683
    %906 = vmatprep.subr.bf16.mxu0 0
    %907 = vmatpush1.bf16.msra.mxu0 %v684
    %908 = vmatprep.subr.bf16.mxu0 0
    %909 = vmatpush1.bf16.msra.mxu0 %v685
    %910 = vmatprep.subr.bf16.mxu0 0
    %911 = vmatpush1.bf16.msra.mxu0 %v686
    %912 = vmatprep.subr.bf16.mxu0 0
    %913 = vmatpush1.bf16.msra.mxu0 %v687
    %914 = vmatprep.subr.bf16.mxu0 0
    %915 = vmatpush1.bf16.msra.mxu0 %v688
    %916 = vmatprep.subr.bf16.mxu0 0
    %917 = vmatpush1.bf16.msra.mxu0 %v689
    %918 = vmatprep.subr.bf16.mxu0 0
    %919 = vmatpush1.bf16.msra.mxu0 %v690
    %920 = vmatprep.subr.bf16.mxu0 0
    %921 = vmatpush1.bf16.msra.mxu0 %v691
    %922 = vmatprep.subr.bf16.mxu0 0
    %923 = vmatpush1.bf16.msra.mxu0 %v692
    %924 = vmatprep.subr.bf16.mxu0 0
    %925 = vmatpush1.bf16.msra.mxu0 %v693
    %926 = vmatprep.mubr.bf16.mxu0 %v70
    %927 = vmatmul.mubr.bf16.gmra.mrb[0].mxu0 %v69
    %v928 = vpop.f32.mrb[0].mxu0
    %v929 = vadd.f32 %v889, %v928
    %v930 = vpop.f32.mrb[0].mxu0
    %v931 = vpop.f32.mrb[0].mxu0
    %v932 = vpop.f32.mrb[0].mxu0
    %933 = vdwg.mxu0
    %934 = vmatprep.subr.bf16.mxu0 0
    %935 = vmatpush1.bf16.msra.mxu0 %v694
    %936 = vmatprep.subr.bf16.mxu0 0
    %937 = vmatpush1.bf16.msra.mxu0 %v695
    %938 = vmatprep.subr.bf16.mxu0 0
    %939 = vmatpush1.bf16.msra.mxu0 %v696
    %940 = vmatprep.subr.bf16.mxu0 0
    %941 = vmatpush1.bf16.msra.mxu0 %v697
    %942 = vmatprep.subr.bf16.mxu0 0
    %943 = vmatpush1.bf16.msra.mxu0 %v698
    %944 = vmatprep.subr.bf16.mxu0 0
    %945 = vmatpush1.bf16.msra.mxu0 %v699
    %946 = vmatprep.subr.bf16.mxu0 0
    %947 = vmatpush1.bf16.msra.mxu0 %v700
    %948 = vmatprep.subr.bf16.mxu0 0
    %949 = vmatpush1.bf16.msra.mxu0 %v701
    %950 = vmatprep.subr.bf16.mxu0 0
    %951 = vmatpush1.bf16.msra.mxu0 %v702
    %952 = vmatprep.subr.bf16.mxu0 0
    %953 = vmatpush1.bf16.msra.mxu0 %v703
    %954 = vmatprep.subr.bf16.mxu0 0
    %955 = vmatpush1.bf16.msra.mxu0 %v704
    %956 = vmatprep.subr.bf16.mxu0 0
    %957 = vmatpush1.bf16.msra.mxu0 %v705
    %958 = vmatprep.subr.bf16.mxu0 0
    %959 = vmatpush1.bf16.msra.mxu0 %v706
    %960 = vmatprep.subr.bf16.mxu0 0
    %961 = vmatpush1.bf16.msra.mxu0 %v707
    %962 = vmatprep.subr.bf16.mxu0 0
    %963 = vmatpush1.bf16.msra.mxu0 %v708
    %964 = vmatprep.subr.bf16.mxu0 0
    %965 = vmatpush1.bf16.msra.mxu0 %v709
    %966 = vmatprep.mubr.bf16.mxu0 %v72
    %967 = vmatmul.mubr.bf16.gmra.mrb[0].mxu0 %v71
    %v968 = vpop.f32.mrb[0].mxu0
    %v969 = vadd.f32 %v929, %v968
    %v970 = vpop.f32.mrb[0].mxu0
    %v971 = vpop.f32.mrb[0].mxu0
    %v972 = vpop.f32.mrb[0].mxu0
    %973 = vdwg.mxu0
    %974 = vmatprep.subr.bf16.mxu0 0
    %975 = vmatpush1.bf16.msra.mxu0 %v710
    %976 = vmatprep.subr.bf16.mxu0 0
    %977 = vmatpush1.bf16.msra.mxu0 %v711
    %978 = vmatprep.subr.bf16.mxu0 0
    %979 = vmatpush1.bf16.msra.mxu0 %v712
    %980 = vmatprep.subr.bf16.mxu0 0
    %981 = vmatpush1.bf16.msra.mxu0 %v713
    %982 = vmatprep.subr.bf16.mxu0 0
    %983 = vmatpush1.bf16.msra.mxu0 %v714
    %984 = vmatprep.subr.bf16.mxu0 0
    %985 = vmatpush1.bf16.msra.mxu0 %v715
    %986 = vmatprep.subr.bf16.mxu0 0
    %987 = vmatpush1.bf16.msra.mxu0 %v716
    %988 = vmatprep.subr.bf16.mxu0 0
    %989 = vmatpush1.bf16.msra.mxu0 %v717
    %990 = vmatprep.subr.bf16.mxu0 0
    %991 = vmatpush1.bf16.msra.mxu0 %v718
    %992 = vmatprep.subr.bf16.mxu0 0
    %993 = vmatpush1.bf16.msra.mxu0 %v719
    %994 = vmatprep.subr.bf16.mxu0 0
    %995 = vmatpush1.bf16.msra.mxu0 %v720
    %996 = vmatprep.subr.bf16.mxu0 0
    %997 = vmatpush1.bf16.msra.mxu0 %v721
    %998 = vmatprep.subr.bf16.mxu0 0
    %999 = vmatpush1.bf16.msra.mxu0 %v722
    %1000 = vmatprep.subr.bf16.mxu0 0
    %1001 = vmatpush1.bf16.msra.mxu0 %v723
    %1002 = vmatprep.subr.bf16.mxu0 0
    %1003 = vmatpush1.bf16.msra.mxu0 %v724
    %1004 = vmatprep.subr.bf16.mxu0 0
    %1005 = vmatpush1.bf16.msra.mxu0 %v725
    %1006 = vmatprep.mubr.bf16.mxu0 %v74
    %1007 = vmatmul.mubr.bf16.gmra.mrb[0].mxu0 %v73
    %v1008 = vpop.f32.mrb[0].mxu0
    %v1009 = vadd.f32 %v969, %v1008
    %v1010 = vpop.f32.mrb[0].mxu0
    %v1011 = vpop.f32.mrb[0].mxu0
    %v1012 = vpop.f32.mrb[0].mxu0
    %1013 = vdwg.mxu0
    %1014 = vmatprep.subr.bf16.mxu0 0
    %1015 = vmatpush1.bf16.msra.mxu0 %v726
    %1016 = vmatprep.subr.bf16.mxu0 0
    %1017 = vmatpush1.bf16.msra.mxu0 %v727
    %1018 = vmatprep.subr.bf16.mxu0 0
    %1019 = vmatpush1.bf16.msra.mxu0 %v728
    %1020 = vmatprep.subr.bf16.mxu0 0
    %1021 = vmatpush1.bf16.msra.mxu0 %v729
    %1022 = vmatprep.subr.bf16.mxu0 0
    %1023 = vmatpush1.bf16.msra.mxu0 %v730
    %1024 = vmatprep.subr.bf16.mxu0 0
    %1025 = vmatpush1.bf16.msra.mxu0 %v731
    %1026 = vmatprep.subr.bf16.mxu0 0
    %1027 = vmatpush1.bf16.msra.mxu0 %v732
    %1028 = vmatprep.subr.bf16.mxu0 0
    %1029 = vmatpush1.bf16.msra.mxu0 %v733
    %1030 = vmatprep.subr.bf16.mxu0 0
    %1031 = vmatpush1.bf16.msra.mxu0 %v734
    %1032 = vmatprep.subr.bf16.mxu0 0
    %1033 = vmatpush1.bf16.msra.mxu0 %v735
    %1034 = vmatprep.subr.bf16.mxu0 0
    %1035 = vmatpush1.bf16.msra.mxu0 %v736
    %1036 = vmatprep.subr.bf16.mxu0 0
    %1037 = vmatpush1.bf16.msra.mxu0 %v737
    %1038 = vmatprep.subr.bf16.mxu0 0
    %1039 = vmatpush1.bf16.msra.mxu0 %v738
    %1040 = vmatprep.subr.bf16.mxu0 0
    %1041 = vmatpush1.bf16.msra.mxu0 %v739
    %1042 = vmatprep.subr.bf16.mxu0 0
    %1043 = vmatpush1.bf16.msra.mxu0 %v740
    %1044 = vmatprep.subr.bf16.mxu0 0
    %1045 = vmatpush1.bf16.msra.mxu0 %v741
    %1046 = vmatprep.mubr.bf16.mxu0 %v76
    %1047 = vmatmul.mubr.bf16.gmra.mrb[0].mxu0 %v75
    %v1048 = vpop.f32.mrb[0].mxu0
    %v1049 = vadd.f32 %v1009, %v1048
    %v1050 = vpop.f32.mrb[0].mxu0
    %v1051 = vpop.f32.mrb[0].mxu0
    %v1052 = vpop.f32.mrb[0].mxu0
    %1053 = vdwg.mxu0
    %1054 = vmatprep.subr.bf16.mxu0 0
    %1055 = vmatpush1.bf16.msra.mxu0 %v742
    %1056 = vmatprep.subr.bf16.mxu0 0
    %1057 = vmatpush1.bf16.msra.mxu0 %v743
    %1058 = vmatprep.subr.bf16.mxu0 0
    %1059 = vmatpush1.bf16.msra.mxu0 %v744
    %1060 = vmatprep.subr.bf16.mxu0 0
    %1061 = vmatpush1.bf16.msra.mxu0 %v745
    %1062 = vmatprep.subr.bf16.mxu0 0
    %1063 = vmatpush1.bf16.msra.mxu0 %v746
    %1064 = vmatprep.subr.bf16.mxu0 0
    %1065 = vmatpush1.bf16.msra.mxu0 %v747
    %1066 = vmatprep.subr.bf16.mxu0 0
    %1067 = vmatpush1.bf16.msra.mxu0 %v748
    %1068 = vmatprep.subr.bf16.mxu0 0
    %1069 = vmatpush1.bf16.msra.mxu0 %v749
    %1070 = vmatprep.subr.bf16.mxu0 0
    %1071 = vmatpush1.bf16.msra.mxu0 %v750
    %1072 = vmatprep.subr.bf16.mxu0 0
    %1073 = vmatpush1.bf16.msra.mxu0 %v751
    %1074 = vmatprep.subr.bf16.mxu0 0
    %1075 = vmatpush1.bf16.msra.mxu0 %v752
    %1076 = vmatprep.subr.bf16.mxu0 0
    %1077 = vmatpush1.bf16.msra.mxu0 %v753
    %1078 = vmatprep.subr.bf16.mxu0 0
    %1079 = vmatpush1.bf16.msra.mxu0 %v754
    %1080 = vmatprep.subr.bf16.mxu0 0
    %1081 = vmatpush1.bf16.msra.mxu0 %v755
    %1082 = vmatprep.subr.bf16.mxu0 0
    %1083 = vmatpush1.bf16.msra.mxu0 %v756
    %1084 = vmatprep.subr.bf16.mxu0 0
    %1085 = vmatpush1.bf16.msra.mxu0 %v757
    %1086 = vmatprep.mubr.bf16.mxu0 %v78
    %1087 = vmatmul.mubr.bf16.gmra.mrb[0].mxu0 %v77
    %v1088 = vpop.f32.mrb[0].mxu0
    %v1089 = vadd.f32 %v1049, %v1088
    %v1090 = vpop.f32.mrb[0].mxu0
    %v1091 = vpop.f32.mrb[0].mxu0
    %v1092 = vpop.f32.mrb[0].mxu0
    %1093 = vdwg.mxu0
    %v1094 = vmax.f32 %v1089, 0.0
    %v1095 = vpack.c.bf16 %v1094, %v1094
    %v1096 = vld [vmem:[%s3] sm:$0xf]
    %v1097 = vld [vmem:[%s3 + $0x4] sm:$0xf]
    %v1098 = vld [vmem:[%s3 + $0x8] sm:$0xf]
    %v1099 = vld [vmem:[%s3 + $0xc] sm:$0xf]
    %v1100 = vld [vmem:[%s3 + $0x10] sm:$0xf]
    %v1101 = vld [vmem:[%s3 + $0x14] sm:$0xf]
    %v1102 = vld [vmem:[%s3 + $0x18] sm:$0xf]
    %v1103 = vld [vmem:[%s3 + $0x1c] sm:$0xf]
    %v1104 = vld [vmem:[%s3 + $0x20] sm:$0xf]
    %v1105 = vld [vmem:[%s3 + $0x24] sm:$0xf]
    %v1106 = vld [vmem:[%s3 + $0x28] sm:$0xf]
    %v1107 = vld [vmem:[%s3 + $0x2c] sm:$0xf]
    %v1108 = vld [vmem:[%s3 + $0x30] sm:$0xf]
    %v1109 = vld [vmem:[%s3 + $0x34] sm:$0xf]
    %v1110 = vld [vmem:[%s3 + $0x38] sm:$0xf]
    %v1111 = vld [vmem:[%s3 + $0x3c] sm:$0xf]
    %v1112 = vld [vmem:[%s4] sm:$0x1]
    %v1114 = vlaneseq
    %v1115 = vshrl.u32 %v1114, 7
    %v1116 = vsub.s32 0, %v1115
    %v1117 = vrot.slane %v1112, %v1116
    %v1135 = vunpack.c.l.b16 %v1096
    %v1136 = vunpack.c.l.b16 %v1097
    %v1137 = vunpack.c.l.b16 %v1098
    %v1138 = vunpack.c.l.b16 %v1099
    %v1139 = vunpack.c.l.b16 %v1100
    %v1140 = vunpack.c.l.b16 %v1101
    %v1141 = vunpack.c.l.b16 %v1102
    %v1142 = vunpack.c.l.b16 %v1103
    %v1143 = vunpack.c.l.b16 %v1104
    %v1144 = vunpack.c.l.b16 %v1105
    %v1145 = vunpack.c.l.b16 %v1106
    %v1146 = vunpack.c.l.b16 %v1107
    %v1147 = vunpack.c.l.b16 %v1108
    %v1148 = vunpack.c.l.b16 %v1109
    %v1149 = vunpack.c.l.b16 %v1110
    %v1150 = vunpack.c.l.b16 %v1111
    %v1151 = vpack.c.b16 %v1136, %v1135
    %v1152 = vpack.c.b16 %v1138, %v1137
    %v1153 = vpack.c.b16 %v1140, %v1139
    %v1154 = vpack.c.b16 %v1142, %v1141
    %v1155 = vpack.c.b16 %v1144, %v1143
    %v1156 = vpack.c.b16 %v1146, %v1145
    %v1157 = vpack.c.b16 %v1148, %v1147
    %v1158 = vpack.c.b16 %v1150, %v1149
    %1167 = vmatprep.subr.bf16.mxu0 0
    %1168 = vmatpush1.bf16.msra.mxu0 %v1151
    %1169 = vmatprep.subr.bf16.mxu0 0
    %1170 = vmatpush1.bf16.msra.mxu0 %v1152
    %1171 = vmatprep.subr.bf16.mxu0 0
    %1172 = vmatpush1.bf16.msra.mxu0 %v1153
    %1173 = vmatprep.subr.bf16.mxu0 0
    %1174 = vmatpush1.bf16.msra.mxu0 %v1154
    %1175 = vmatprep.subr.bf16.mxu0 0
    %1176 = vmatpush1.bf16.msra.mxu0 %v1155
    %1177 = vmatprep.subr.bf16.mxu0 0
    %1178 = vmatpush1.bf16.msra.mxu0 %v1156
    %1179 = vmatprep.subr.bf16.mxu0 0
    %1180 = vmatpush1.bf16.msra.mxu0 %v1157
    %1181 = vmatprep.subr.bf16.mxu0 0
    %1182 = vmatpush1.bf16.msra.mxu0 %v1158
    %1183 = vmatprep.subr.bf16.mxu0 0
    %1184 = vmatpush1.bf16.msra.mxu0 0
    %1185 = vmatprep.subr.bf16.mxu0 0
    %1186 = vmatpush1.bf16.msra.mxu0 0
    %1187 = vmatprep.subr.bf16.mxu0 0
    %1188 = vmatpush1.bf16.msra.mxu0 0
    %1189 = vmatprep.subr.bf16.mxu0 0
    %1190 = vmatpush1.bf16.msra.mxu0 0
    %1191 = vmatprep.subr.bf16.mxu0 0
    %1192 = vmatpush1.bf16.msra.mxu0 0
    %1193 = vmatprep.subr.bf16.mxu0 0
    %1194 = vmatpush1.bf16.msra.mxu0 0
    %1195 = vmatprep.subr.bf16.mxu0 0
    %1196 = vmatpush1.bf16.msra.mxu0 0
    %1197 = vmatprep.subr.bf16.mxu0 0
    %1198 = vmatpush1.bf16.msra.mxu0 0
    %1199 = vmatprep.mubr.bf16.mxu0 0
    %1200 = vmatmul.mubr.bf16.gmra.mrb[0].mxu0 %v1095
    %v1201 = vpop.f32.mrb[0].mxu0
    %v1202 = vadd.f32 %v1117, %v1201
    %v1203 = vpop.f32.mrb[0].mxu0
    %v1204 = vpop.f32.mrb[0].mxu0
    %v1205 = vpop.f32.mrb[0].mxu0
    %1206 = vdwg.mxu0
    %v1207 = vmax.f32 %v1202, 0.0
    %v1208 = vpack.c.bf16 %v1207, %v1207
    %v1209 = vld [vmem:[#allocation4] sm:$0xff]
    %v1210 = vld [vmem:[#allocation4 + $0x8] sm:$0xff]
    %v1211 = vld [vmem:[#allocation4 + $0x10] sm:$0xff]
    %v1212 = vld [vmem:[#allocation4 + $0x18] sm:$0xff]
    %v1213 = vld [vmem:[#allocation4 + $0x20] sm:$0xff]
    %v1214 = vld [vmem:[#allocation4 + $0x28] sm:$0xff]
    %v1215 = vld [vmem:[#allocation4 + $0x30] sm:$0xff]
    %v1216 = vld [vmem:[#allocation4 + $0x38] sm:$0xff]
    %v1217 = vld [vmem:[#allocation4 + $0x40] sm:$0xff]
    %v1218 = vld [vmem:[#allocation4 + $0x48] sm:$0xff]
    %v1219 = vld [vmem:[#allocation4 + $0x50] sm:$0xff]
    %v1220 = vld [vmem:[#allocation4 + $0x58] sm:$0xff]
    %v1221 = vld [vmem:[#allocation4 + $0x60] sm:$0xff]
    %v1222 = vld [vmem:[#allocation4 + $0x68] sm:$0xff]
    %v1223 = vld [vmem:[#allocation4 + $0x70] sm:$0xff]
    %v1224 = vld [vmem:[#allocation4 + $0x78] sm:$0xff]
    %v1225 = vld [vmem:[#allocation4 + $0x80] sm:$0xff]
    %v1226 = vld [vmem:[#allocation4 + $0x88] sm:$0xff]
    %v1227 = vld [vmem:[#allocation4 + $0x90] sm:$0xff]
    %v1228 = vld [vmem:[#allocation4 + $0x98] sm:$0xff]
    %v1229 = vld [vmem:[#allocation4 + $0xa0] sm:$0xff]
    %v1230 = vld [vmem:[#allocation4 + $0xa8] sm:$0xff]
    %v1231 = vld [vmem:[#allocation4 + $0xb0] sm:$0xff]
    %v1232 = vld [vmem:[#allocation4 + $0xb8] sm:$0xff]
    %v1233 = vld [vmem:[#allocation4 + $0xc0] sm:$0xff]
    %v1234 = vld [vmem:[#allocation4 + $0xc8] sm:$0xff]
    %v1235 = vld [vmem:[#allocation4 + $0xd0] sm:$0xff]
    %v1236 = vld [vmem:[#allocation4 + $0xd8] sm:$0xff]
    %v1237 = vld [vmem:[#allocation4 + $0xe0] sm:$0xff]
    %v1238 = vld [vmem:[#allocation4 + $0xe8] sm:$0xff]
    %v1239 = vld [vmem:[#allocation4 + $0xf0] sm:$0xff]
    %v1240 = vld [vmem:[#allocation4 + $0xf8] sm:$0xff]
    %v1241 = vld [vmem:[#allocation4 + $0x100] sm:$0xff]
    %v1242 = vld [vmem:[#allocation4 + $0x108] sm:$0xff]
    %v1243 = vld [vmem:[#allocation4 + $0x110] sm:$0xff]
    %v1244 = vld [vmem:[#allocation4 + $0x118] sm:$0xff]
    %v1245 = vld [vmem:[#allocation4 + $0x120] sm:$0xff]
    %v1246 = vld [vmem:[#allocation4 + $0x128] sm:$0xff]
    %v1247 = vld [vmem:[#allocation4 + $0x130] sm:$0xff]
    %v1248 = vld [vmem:[#allocation4 + $0x138] sm:$0xff]
    %v1249 = vld [vmem:[#allocation4 + $0x140] sm:$0xff]
    %v1250 = vld [vmem:[#allocation4 + $0x148] sm:$0xff]
    %v1251 = vld [vmem:[#allocation4 + $0x150] sm:$0xff]
    %v1252 = vld [vmem:[#allocation4 + $0x158] sm:$0xff]
    %v1253 = vld [vmem:[#allocation4 + $0x160] sm:$0xff]
    %v1254 = vld [vmem:[#allocation4 + $0x168] sm:$0xff]
    %v1255 = vld [vmem:[#allocation4 + $0x170] sm:$0xff]
    %v1256 = vld [vmem:[#allocation4 + $0x178] sm:$0xff]
    %v1257 = vld [vmem:[%s6] sm:$0x3f]
    %v1259 = vlaneseq
    %v1260 = vshrl.u32 %v1259, 7
    %v1261 = vsub.s32 0, %v1260
    %v1262 = vrot.slane %v1257, %v1261
    %v1263 = vlaneseq
    %v1264 = vshrl.u32 %v1263, 7
    %v1265 = vsub.s32 1, %v1264
    %v1266 = vrot.slane %v1257, %v1265
    %v1267 = vlaneseq
    %v1268 = vshrl.u32 %v1267, 7
    %v1269 = vsub.s32 2, %v1268
    %v1270 = vrot.slane %v1257, %v1269
    %v1271 = vlaneseq
    %v1272 = vshrl.u32 %v1271, 7
    %v1273 = vsub.s32 3, %v1272
    %v1274 = vrot.slane %v1257, %v1273
    %v1275 = vlaneseq
    %v1276 = vshrl.u32 %v1275, 7
    %v1277 = vsub.s32 4, %v1276
    %v1278 = vrot.slane %v1257, %v1277
    %v1279 = vlaneseq
    %v1280 = vshrl.u32 %v1279, 7
    %v1281 = vsub.s32 5, %v1280
    %v1282 = vrot.slane %v1257, %v1281
    %v1337 = vunpack.c.l.b16 %v1209
    %v1338 = vunpack.c.h.b16 %v1209
    %v1339 = vunpack.c.l.b16 %v1210
    %v1340 = vunpack.c.h.b16 %v1210
    %v1341 = vunpack.c.l.b16 %v1211
    %v1342 = vunpack.c.h.b16 %v1211
    %v1343 = vunpack.c.l.b16 %v1212
    %v1344 = vunpack.c.h.b16 %v1212
    %v1345 = vunpack.c.l.b16 %v1213
    %v1346 = vunpack.c.h.b16 %v1213
    %v1347 = vunpack.c.l.b16 %v1214
    %v1348 = vunpack.c.h.b16 %v1214
    %v1349 = vunpack.c.l.b16 %v1215
    %v1350 = vunpack.c.h.b16 %v1215
    %v1351 = vunpack.c.l.b16 %v1216
    %v1352 = vunpack.c.h.b16 %v1216
    %v1353 = vunpack.c.l.b16 %v1217
    %v1354 = vunpack.c.h.b16 %v1217
    %v1355 = vunpack.c.l.b16 %v1218
    %v1356 = vunpack.c.h.b16 %v1218
    %v1357 = vunpack.c.l.b16 %v1219
    %v1358 = vunpack.c.h.b16 %v1219
    %v1359 = vunpack.c.l.b16 %v1220
    %v1360 = vunpack.c.h.b16 %v1220
    %v1361 = vunpack.c.l.b16 %v1221
    %v1362 = vunpack.c.h.b16 %v1221
    %v1363 = vunpack.c.l.b16 %v1222
    %v1364 = vunpack.c.h.b16 %v1222
    %v1365 = vunpack.c.l.b16 %v1223
    %v1366 = vunpack.c.h.b16 %v1223
    %v1367 = vunpack.c.l.b16 %v1224
    %v1368 = vunpack.c.h.b16 %v1224
    %v1369 = vunpack.c.l.b16 %v1225
    %v1370 = vunpack.c.h.b16 %v1225
    %v1371 = vunpack.c.l.b16 %v1226
    %v1372 = vunpack.c.h.b16 %v1226
    %v1373 = vunpack.c.l.b16 %v1227
    %v1374 = vunpack.c.h.b16 %v1227
    %v1375 = vunpack.c.l.b16 %v1228
    %v1376 = vunpack.c.h.b16 %v1228
    %v1377 = vunpack.c.l.b16 %v1229
    %v1378 = vunpack.c.h.b16 %v1229
    %v1379 = vunpack.c.l.b16 %v1230
    %v1380 = vunpack.c.h.b16 %v1230
    %v1381 = vunpack.c.l.b16 %v1231
    %v1382 = vunpack.c.h.b16 %v1231
    %v1383 = vunpack.c.l.b16 %v1232
    %v1384 = vunpack.c.h.b16 %v1232
    %v1385 = vunpack.c.l.b16 %v1233
    %v1386 = vunpack.c.h.b16 %v1233
    %v1387 = vunpack.c.l.b16 %v1234
    %v1388 = vunpack.c.h.b16 %v1234
    %v1389 = vunpack.c.l.b16 %v1235
    %v1390 = vunpack.c.h.b16 %v1235
    %v1391 = vunpack.c.l.b16 %v1236
    %v1392 = vunpack.c.h.b16 %v1236
    %v1393 = vunpack.c.l.b16 %v1237
    %v1394 = vunpack.c.h.b16 %v1237
    %v1395 = vunpack.c.l.b16 %v1238
    %v1396 = vunpack.c.h.b16 %v1238
    %v1397 = vunpack.c.l.b16 %v1239
    %v1398 = vunpack.c.h.b16 %v1239
    %v1399 = vunpack.c.l.b16 %v1240
    %v1400 = vunpack.c.h.b16 %v1240
    %v1401 = vunpack.c.l.b16 %v1241
    %v1402 = vunpack.c.h.b16 %v1241
    %v1403 = vunpack.c.l.b16 %v1242
    %v1404 = vunpack.c.h.b16 %v1242
    %v1405 = vunpack.c.l.b16 %v1243
    %v1406 = vunpack.c.h.b16 %v1243
    %v1407 = vunpack.c.l.b16 %v1244
    %v1408 = vunpack.c.h.b16 %v1244
    %v1409 = vunpack.c.l.b16 %v1245
    %v1410 = vunpack.c.h.b16 %v1245
    %v1411 = vunpack.c.l.b16 %v1246
    %v1412 = vunpack.c.h.b16 %v1246
    %v1413 = vunpack.c.l.b16 %v1247
    %v1414 = vunpack.c.h.b16 %v1247
    %v1415 = vunpack.c.l.b16 %v1248
    %v1416 = vunpack.c.h.b16 %v1248
    %v1417 = vunpack.c.l.b16 %v1249
    %v1418 = vunpack.c.h.b16 %v1249
    %v1419 = vunpack.c.l.b16 %v1250
    %v1420 = vunpack.c.h.b16 %v1250
    %v1421 = vunpack.c.l.b16 %v1251
    %v1422 = vunpack.c.h.b16 %v1251
    %v1423 = vunpack.c.l.b16 %v1252
    %v1424 = vunpack.c.h.b16 %v1252
    %v1425 = vunpack.c.l.b16 %v1253
    %v1426 = vunpack.c.h.b16 %v1253
    %v1427 = vunpack.c.l.b16 %v1254
    %v1428 = vunpack.c.h.b16 %v1254
    %v1429 = vunpack.c.l.b16 %v1255
    %v1430 = vunpack.c.h.b16 %v1255
    %v1431 = vunpack.c.l.b16 %v1256
    %v1432 = vunpack.c.h.b16 %v1256
    %v1433 = vpack.c.b16 %v1343, %v1337
    %v1434 = vpack.c.b16 %v1344, %v1338
    %v1435 = vpack.c.b16 %v1345, %v1339
    %v1436 = vpack.c.b16 %v1346, %v1340
    %v1437 = vpack.c.b16 %v1347, %v1341
    %v1438 = vpack.c.b16 %v1348, %v1342
    %v1439 = vpack.c.b16 %v1355, %v1349
    %v1440 = vpack.c.b16 %v1356, %v1350
    %v1441 = vpack.c.b16 %v1357, %v1351
    %v1442 = vpack.c.b16 %v1358, %v1352
    %v1443 = vpack.c.b16 %v1359, %v1353
    %v1444 = vpack.c.b16 %v1360, %v1354
    %v1445 = vpack.c.b16 %v1367, %v1361
    %v1446 = vpack.c.b16 %v1368, %v1362
    %v1447 = vpack.c.b16 %v1369, %v1363
    %v1448 = vpack.c.b16 %v1370, %v1364
    %v1449 = vpack.c.b16 %v1371, %v1365
    %v1450 = vpack.c.b16 %v1372, %v1366
    %v1451 = vpack.c.b16 %v1379, %v1373
    %v1452 = vpack.c.b16 %v1380, %v1374
    %v1453 = vpack.c.b16 %v1381, %v1375
    %v1454 = vpack.c.b16 %v1382, %v1376
    %v1455 = vpack.c.b16 %v1383, %v1377
    %v1456 = vpack.c.b16 %v1384, %v1378
    %v1457 = vpack.c.b16 %v1391, %v1385
    %v1458 = vpack.c.b16 %v1392, %v1386
    %v1459 = vpack.c.b16 %v1393, %v1387
    %v1460 = vpack.c.b16 %v1394, %v1388
    %v1461 = vpack.c.b16 %v1395, %v1389
    %v1462 = vpack.c.b16 %v1396, %v1390
    %v1463 = vpack.c.b16 %v1403, %v1397
    %v1464 = vpack.c.b16 %v1404, %v1398
    %v1465 = vpack.c.b16 %v1405, %v1399
    %v1466 = vpack.c.b16 %v1406, %v1400
    %v1467 = vpack.c.b16 %v1407, %v1401
    %v1468 = vpack.c.b16 %v1408, %v1402
    %v1469 = vpack.c.b16 %v1415, %v1409
    %v1470 = vpack.c.b16 %v1416, %v1410
    %v1471 = vpack.c.b16 %v1417, %v1411
    %v1472 = vpack.c.b16 %v1418, %v1412
    %v1473 = vpack.c.b16 %v1419, %v1413
    %v1474 = vpack.c.b16 %v1420, %v1414
    %v1475 = vpack.c.b16 %v1427, %v1421
    %v1476 = vpack.c.b16 %v1428, %v1422
    %v1477 = vpack.c.b16 %v1429, %v1423
    %v1478 = vpack.c.b16 %v1430, %v1424
    %v1479 = vpack.c.b16 %v1431, %v1425
    %v1480 = vpack.c.b16 %v1432, %v1426
    %1529 = vmatprep.subr.bf16.mxu0 %v1434
    %1530 = vmatpush1.bf16.msra.mxu0 %v1433
    %1531 = vmatprep.subr.bf16.mxu0 %v1440
    %1532 = vmatpush1.bf16.msra.mxu0 %v1439
    %1533 = vmatprep.subr.bf16.mxu0 %v1446
    %1534 = vmatpush1.bf16.msra.mxu0 %v1445
    %1535 = vmatprep.subr.bf16.mxu0 %v1452
    %1536 = vmatpush1.bf16.msra.mxu0 %v1451
    %1537 = vmatprep.subr.bf16.mxu0 %v1458
    %1538 = vmatpush1.bf16.msra.mxu0 %v1457
    %1539 = vmatprep.subr.bf16.mxu0 %v1464
    %1540 = vmatpush1.bf16.msra.mxu0 %v1463
    %1541 = vmatprep.subr.bf16.mxu0 %v1470
    %1542 = vmatpush1.bf16.msra.mxu0 %v1469
    %1543 = vmatprep.subr.bf16.mxu0 %v1476
    %1544 = vmatpush1.bf16.msra.mxu0 %v1475
    %1545 = vmatprep.subr.bf16.mxu0 0
    %1546 = vmatpush1.bf16.msra.mxu0 0
    %1547 = vmatprep.subr.bf16.mxu0 0
    %1548 = vmatpush1.bf16.msra.mxu0 0
    %1549 = vmatprep.subr.bf16.mxu0 0
    %1550 = vmatpush1.bf16.msra.mxu0 0
    %1551 = vmatprep.subr.bf16.mxu0 0
    %1552 = vmatpush1.bf16.msra.mxu0 0
    %1553 = vmatprep.subr.bf16.mxu0 0
    %1554 = vmatpush1.bf16.msra.mxu0 0
    %1555 = vmatprep.subr.bf16.mxu0 0
    %1556 = vmatpush1.bf16.msra.mxu0 0
    %1557 = vmatprep.subr.bf16.mxu0 0
    %1558 = vmatpush1.bf16.msra.mxu0 0
    %1559 = vmatprep.subr.bf16.mxu0 0
    %1560 = vmatpush1.bf16.msra.mxu0 0
    %1561 = vmatprep.mubr.bf16.mxu0 0
    %1562 = vmatmul.mubr.bf16.gmra.mrb[0].mxu0 %v1208
    %v1563 = vpop.f32.mrb[0].mxu0
    %v1564 = vadd.f32 %v1262, %v1563
    %v1565 = vpop.f32.mrb[0].mxu0
    %v1566 = vadd.f32 %v1266, %v1565
    %v1567 = vpop.f32.mrb[0].mxu0
    %v1568 = vpop.f32.mrb[0].mxu0
    %1569 = vdwg.mxu0
    %1570 = vmatprep.subr.bf16.mxu0 %v1436
    %1571 = vmatpush1.bf16.msra.mxu0 %v1435
    %1572 = vmatprep.subr.bf16.mxu0 %v1442
    %1573 = vmatpush1.bf16.msra.mxu0 %v1441
    %1574 = vmatprep.subr.bf16.mxu0 %v1448
    %1575 = vmatpush1.bf16.msra.mxu0 %v1447
    %1576 = vmatprep.subr.bf16.mxu0 %v1454
    %1577 = vmatpush1.bf16.msra.mxu0 %v1453
    %1578 = vmatprep.subr.bf16.mxu0 %v1460
    %1579 = vmatpush1.bf16.msra.mxu0 %v1459
    %1580 = vmatprep.subr.bf16.mxu0 %v1466
    %1581 = vmatpush1.bf16.msra.mxu0 %v1465
    %1582 = vmatprep.subr.bf16.mxu0 %v1472
    %1583 = vmatpush1.bf16.msra.mxu0 %v1471
    %1584 = vmatprep.subr.bf16.mxu0 %v1478
    %1585 = vmatpush1.bf16.msra.mxu0 %v1477
    %1586 = vmatprep.subr.bf16.mxu0 0
    %1587 = vmatpush1.bf16.msra.mxu0 0
    %1588 = vmatprep.subr.bf16.mxu0 0
    %1589 = vmatpush1.bf16.msra.mxu0 0
    %1590 = vmatprep.subr.bf16.mxu0 0
    %1591 = vmatpush1.bf16.msra.mxu0 0
    %1592 = vmatprep.subr.bf16.mxu0 0
    %1593 = vmatpush1.bf16.msra.mxu0 0
    %1594 = vmatprep.subr.bf16.mxu0 0
    %1595 = vmatpush1.bf16.msra.mxu0 0
    %1596 = vmatprep.subr.bf16.mxu0 0
    %1597 = vmatpush1.bf16.msra.mxu0 0
    %1598 = vmatprep.subr.bf16.mxu0 0
    %1599 = vmatpush1.bf16.msra.mxu0 0
    %1600 = vmatprep.subr.bf16.mxu0 0
    %1601 = vmatpush1.bf16.msra.mxu0 0
    %1602 = vmatprep.mubr.bf16.mxu0 0
    %1603 = vmatmul.mubr.bf16.gmra.mrb[0].mxu0 %v1208
    %v1604 = vpop.f32.mrb[0].mxu0
    %v1605 = vadd.f32 %v1270, %v1604
    %v1606 = vpop.f32.mrb[0].mxu0
    %v1607 = vadd.f32 %v1274, %v1606
    %v1608 = vpop.f32.mrb[0].mxu0
    %v1609 = vpop.f32.mrb[0].mxu0
    %1610 = vdwg.mxu0
    %1611 = vmatprep.subr.bf16.mxu0 %v1438
    %1612 = vmatpush1.bf16.msra.mxu0 %v1437
    %1613 = vmatprep.subr.bf16.mxu0 %v1444
    %1614 = vmatpush1.bf16.msra.mxu0 %v1443
    %1615 = vmatprep.subr.bf16.mxu0 %v1450
    %1616 = vmatpush1.bf16.msra.mxu0 %v1449
    %1617 = vmatprep.subr.bf16.mxu0 %v1456
    %1618 = vmatpush1.bf16.msra.mxu0 %v1455
    %1619 = vmatprep.subr.bf16.mxu0 %v1462
    %1620 = vmatpush1.bf16.msra.mxu0 %v1461
    %1621 = vmatprep.subr.bf16.mxu0 %v1468
    %1622 = vmatpush1.bf16.msra.mxu0 %v1467
    %1623 = vmatprep.subr.bf16.mxu0 %v1474
    %1624 = vmatpush1.bf16.msra.mxu0 %v1473
    %1625 = vmatprep.subr.bf16.mxu0 %v1480
    %1626 = vmatpush1.bf16.msra.mxu0 %v1479
    %1627 = vmatprep.subr.bf16.mxu0 0
    %1628 = vmatpush1.bf16.msra.mxu0 0
    %1629 = vmatprep.subr.bf16.mxu0 0
    %1630 = vmatpush1.bf16.msra.mxu0 0
    %1631 = vmatprep.subr.bf16.mxu0 0
    %1632 = vmatpush1.bf16.msra.mxu0 0
    %1633 = vmatprep.subr.bf16.mxu0 0
    %1634 = vmatpush1.bf16.msra.mxu0 0
    %1635 = vmatprep.subr.bf16.mxu0 0
    %1636 = vmatpush1.bf16.msra.mxu0 0
    %1637 = vmatprep.subr.bf16.mxu0 0
    %1638 = vmatpush1.bf16.msra.mxu0 0
    %1639 = vmatprep.subr.bf16.mxu0 0
    %1640 = vmatpush1.bf16.msra.mxu0 0
    %1641 = vmatprep.subr.bf16.mxu0 0
    %1642 = vmatpush1.bf16.msra.mxu0 0
    %1643 = vmatprep.mubr.bf16.mxu0 0
    %1644 = vmatmul.mubr.bf16.gmra.mrb[0].mxu0 %v1208
    %v1645 = vpop.f32.mrb[0].mxu0
    %v1646 = vadd.f32 %v1278, %v1645
    %v1647 = vpop.f32.mrb[0].mxu0
    %v1648 = vadd.f32 %v1282, %v1647
    %v1649 = vpop.f32.mrb[0].mxu0
    %v1650 = vpop.f32.mrb[0].mxu0
    %1651 = vdwg.mxu0
    %v1652 = vtanh.pop %v1564
    %v1653 = vtanh.pop %v1566
    %v1654 = vtanh.pop %v1605
    %v1655 = vtanh.pop %v1607
    %v1656 = vtanh.pop %v1646
    %v1657 = vtanh.pop %v1648
    %v1658 = vpack.c.bf16 %v1652, %v1652
    %v1659 = vpack.c.bf16 %v1653, %v1653
    %v1660 = vpack.c.bf16 %v1654, %v1654
    %v1661 = vpack.c.bf16 %v1655, %v1655
    %v1662 = vpack.c.bf16 %v1656, %v1656
    %v1663 = vpack.c.bf16 %v1657, %v1657
    %v1670 = vunpack.c.l.b16 %v1658
    %v1671 = vunpack.c.l.b16 %v1659
    %v1672 = vunpack.c.l.b16 %v1660
    %v1673 = vunpack.c.l.b16 %v1661
    %v1674 = vunpack.c.l.b16 %v1662
    %v1675 = vunpack.c.l.b16 %v1663
    %v1676 = vpack.c.b16 %v1671, %v1670
    %v1677 = vpack.c.b16 %v1673, %v1672
    %v1678 = vpack.c.b16 %v1675, %v1674
    %1682 = vst [vmem:[%s7] sm:$0xff] %v1676
    %1683 = vst [vmem:[%s7 + $0x8] sm:$0xff] %v1677
    %1684 = vst [vmem:[%s7 + $0x10] sm:$0xff] %v1678
    // Predicated region
    $region38: #{fully_connected_forward.1} parent=1 // pred_check
      _
    $region39: #{fully_connected_forward.1} parent=1 // pred_check_branch
      %1686 = sbr.rel (0) target = $region41
    $region40: #{fully_connected_forward.1} parent=1 // pred_region
      _
    $region41: #{fully_connected_forward.1} parent=1 // pred_fallthru
      _
    // Predicated region
    $region42: #{fully_connected_forward.1} parent=1 // pred_check
      _
    $region43: #{fully_connected_forward.1} parent=1 // pred_check_branch
      %1688 = sbr.rel (0) target = $region45
    $region44: #{fully_connected_forward.1} parent=1 // pred_region
      _
    $region45: #{fully_connected_forward.1} parent=1 // pred_fallthru
      _
    %1689 = vsyncpa [#allocation3], 1
    %1690 = vsyncpa [#allocation5], 1

</llo_original>
